<compile_context>
chip_gen: v7x
topology: tpu7x:2x2x1
jax: 0.10.0
libtpu: 0.0.40
codegen_flags: <defaults>
</compile_context>

<pallas_src>
import jax
import jax.numpy as jnp
from jax import lax
from jax.experimental import pallas as pl
from jax.experimental.pallas import tpu as pltpu

NUM_HIDDENS = 256
NUM_HEADS = 4
HEAD_DIM = NUM_HIDDENS // NUM_HEADS  # 64


def attention_block_kernel(x_ref, wqkv_ref, wo_ref, o_ref):
    """One grid step: block_b batch elements of fused-QKV 4-head attention."""
    wqkv = wqkv_ref[...]                      # (H, 3H) bf16, Q columns pre-scaled
    wo = wo_ref[...]                          # (H, H)  bf16
    block_b = x_ref.shape[0]

    for b in range(block_b):                  # static unroll (block_b is small)
        x = x_ref[b]                          # (S, H) bf16

        # Fused QKV projection: single MXU pass, N = 768.
        qkv = jnp.dot(x, wqkv, preferred_element_type=jnp.float32)   # (S, 3H) f32

        # Slices at 256/512 offsets -> lane-tile aligned (multiples of 128).
        q = qkv[:, :NUM_HIDDENS].astype(jnp.bfloat16)                # pre-scaled
        k = qkv[:, NUM_HIDDENS:2 * NUM_HIDDENS].astype(jnp.bfloat16)
        v = qkv[:, 2 * NUM_HIDDENS:].astype(jnp.bfloat16)

        acc = jnp.zeros((x.shape[0], NUM_HIDDENS), jnp.float32)      # (S, H)

        for h in range(NUM_HEADS):            # static unroll over heads
            lo = h * HEAD_DIM
            hi = lo + HEAD_DIM
            # NOTE: 64-lane head slices at offsets 64/192 split a lane tile;
            # acceptable at these shapes (minor relayout, no VMEM round trip).
            qh = q[:, lo:hi]                  # (S, 64) bf16 (already * 1/sqrt(d))
            kh = k[:, lo:hi]
            vh = v[:, lo:hi]

            # Scores without an explicit transpose: contract last axes.
            s = lax.dot_general(
                qh, kh, dimension_numbers=(((1,), (1,)), ((), ())),
                preferred_element_type=jnp.float32)                  # (S, S) f32

            # masked_fill in the reference is a no-op (result discarded)
            # -> no masking here, matching the module's actual semantics.

            # Numerically-stable softmax in f32; EUP handles exp + approx recip.
            s = s - jnp.max(s, axis=-1, keepdims=True)
            e = jnp.exp(s)
            p = e * pl.reciprocal(jnp.sum(e, axis=-1, keepdims=True), approx=True)

            oh = jnp.dot(p.astype(jnp.bfloat16), vh,
                         preferred_element_type=jnp.float32)         # (S, 64) f32

            # Accumulate the output projection per head (no concat relayout).
            acc = acc + jnp.dot(oh.astype(jnp.bfloat16), wo[lo:hi, :],
                                preferred_element_type=jnp.float32)  # (S, H) f32

        o_ref[b] = acc.astype(o_ref.dtype)


def prepare_weights(wq, wk, wv, wo):
    """Precompute (once, outside the per-call path) the fused/transposed bf16
    weights.  nn.Linear weights use the (out, in) convention -> transpose to
    (in, out).  The 1/sqrt(head_dim) attention scale is folded into Wq."""
    scale = 1.0 / (HEAD_DIM ** 0.5)           # 0.125, exactly representable
    wqkv = jnp.concatenate([wq.T * scale, wk.T, wv.T], axis=1)       # (H, 3H)
    return wqkv.astype(jnp.bfloat16), wo.T.astype(jnp.bfloat16)      # (H, H)


def attention_block(x, m, wqkv, wo_t, *, block_b=1):
    """x: (B, S, H) float32; m: mask (unused, matches reference semantics).
    wqkv: (H, 3H) bf16 fused weight (Q pre-scaled); wo_t: (H, H) bf16."""
    del m  # masked_fill in the reference is a no-op; mask does not affect output
    B, S, H = x.shape
    assert H == NUM_HIDDENS
    assert B % block_b == 0
    x_bf16 = x.astype(jnp.bfloat16)           # bf16 HBM traffic for activations

    return pl.pallas_call(
        attention_block_kernel,
        out_shape=jax.ShapeDtypeStruct((B, S, H), x.dtype),
        grid=(B // block_b,),
        in_specs=[
            pl.BlockSpec((block_b, S, H), lambda b: (b, 0, 0)),
            pl.BlockSpec((H, 3 * H), lambda b: (0, 0)),
            pl.BlockSpec((H, H), lambda b: (0, 0)),
        ],
        out_specs=pl.BlockSpec((block_b, S, H), lambda b: (b, 0, 0)),
        compiler_params=pltpu.CompilerParams(dimension_semantics=("parallel",)),
    )(x_bf16, wqkv, wo_t)


def _reference(x, m, wq, wk, wv, wo):
    """Pure-JAX f32 reference mirroring the PyTorch forward."""
    B, S, H = x.shape
    q = x @ wq.T
    k = x @ wk.T
    v = x @ wv.T

    def split(t):
        return t.reshape(B, S, NUM_HEADS, HEAD_DIM).transpose(0, 2, 1, 3)

    q, k, v = split(q), split(k), split(v)
    a = jnp.einsum("bhqd,bhkd->bhqk", q, k) / (HEAD_DIM ** 0.5)
    # masked_fill is a no-op in the reference -> skip masking.
    a = jax.nn.softmax(a, axis=-1)
    o = jnp.einsum("bhqk,bhkd->bhqd", a, v)
    o = o.transpose(0, 2, 1, 3).reshape(B, S, H)
    return o @ wo.T


if __name__ == "__main__":
    B, S, H = 2, 8, NUM_HIDDENS
    key = jax.random.PRNGKey(0)
    kx, kq, kk, kv, ko = jax.random.split(key, 5)

    x = jax.random.normal(kx, (B, S, H), dtype=jnp.float32)
    m = jnp.ones((B, S, S), dtype=jnp.float32)      # mask (no-op, see note above)

    # Deterministic parameter init (PyTorch Linear weight shape: (out, in)).
    bound = 1.0 / (H ** 0.5)
    wq = jax.random.uniform(kq, (H, H), jnp.float32, -bound, bound)
    wk = jax.random.uniform(kk, (H, H), jnp.float32, -bound, bound)
    wv = jax.random.uniform(kv, (H, H), jnp.float32, -bound, bound)
    wo = jax.random.uniform(ko, (H, H), jnp.float32, -bound, bound)

    # Weight prep done once, outside the per-call path (fuse/transpose/scale/bf16).
    wqkv, wo_t = prepare_weights(wq, wk, wv, wo)
    wqkv, wo_t = jax.block_until_ready((wqkv, wo_t))

    out = attention_block(x, m, wqkv, wo_t, block_b=1)
    out = jax.block_until_ready(out)

    ref = _reference(x, m, wq, wk, wv, wo)
    assert out.shape == (B, S, H)
    # bf16 MXU inputs with f32 accumulation -> looser tolerance than pure f32.
    assert jnp.allclose(out, ref, atol=2e-2, rtol=2e-2), "mismatch vs reference"

    print("KERNEL_OK")
</pallas_src>

<mosaic_0001>
module attributes {stable_mosaic.version = 11 : i64} {
  func.func @attention_block_kernel(%arg0: i32, %arg1: memref<1x8x256xbf16, #tpu.memory_space<vmem>>, %arg2: memref<256x768xbf16, #tpu.memory_space<vmem>>, %arg3: memref<256x256xbf16, #tpu.memory_space<vmem>>, %arg4: memref<1x8x256xf32, #tpu.memory_space<vmem>>) attributes {dimension_semantics = [#tpu.dimension_semantics<parallel>], iteration_bounds = array<i64: 2>, scalar_prefetch = 0 : i64, scratch_operands = 0 : i64, tpu.core_type = #tpu.core_type<tc>, window_params = [{transform_indices = @transform_0, window_bounds = array<i64: 1, 8, 256>}, {pipeline_mode = #tpu.pipeline_mode<synchronous>, transform_indices = @transform_1, window_bounds = array<i64: 256, 768>}, {pipeline_mode = #tpu.pipeline_mode<synchronous>, transform_indices = @transform_2, window_bounds = array<i64: 256, 256>}, {transform_indices = @transform_3, window_bounds = array<i64: 1, 8, 256>}]} {
    %c0 = arith.constant 0 : index
    %c0_0 = arith.constant 0 : index
    %0 = vector.load %arg2[%c0, %c0_0] : memref<256x768xbf16, #tpu.memory_space<vmem>>, vector<256x768xbf16>
    %c0_1 = arith.constant 0 : index
    %c0_2 = arith.constant 0 : index
    %1 = vector.load %arg3[%c0_1, %c0_2] : memref<256x256xbf16, #tpu.memory_space<vmem>>, vector<256x256xbf16>
    %c0_3 = arith.constant 0 : index
    %c0_4 = arith.constant 0 : index
    %c0_5 = arith.constant 0 : index
    %2 = vector.load %arg1[%c0_3, %c0_4, %c0_5] : memref<1x8x256xbf16, #tpu.memory_space<vmem>>, vector<1x8x256xbf16>
    %3 = vector.shape_cast %2 : vector<1x8x256xbf16> to vector<8x256xbf16>
    %cst = arith.constant dense<0.000000e+00> : vector<8x768xf32>
    %4 = tpu.matmul %3, %0, %cst {dimension_numbers = #tpu.dot_dimension_numbers<[1], [0], [0], [1], [0, 0, 1, 1], [], []>} : vector<8x256xbf16>, vector<256x768xbf16>, vector<8x768xf32> -> vector<8x768xf32>
    %5 = vector.extract_strided_slice %4 {offsets = [0, 0], sizes = [8, 256], strides = [1, 1]} : vector<8x768xf32> to vector<8x256xf32>
    %6 = arith.truncf %5 : vector<8x256xf32> to vector<8x256xbf16>
    %7 = vector.extract_strided_slice %4 {offsets = [0, 256], sizes = [8, 256], strides = [1, 1]} : vector<8x768xf32> to vector<8x256xf32>
    %8 = arith.truncf %7 : vector<8x256xf32> to vector<8x256xbf16>
    %9 = vector.extract_strided_slice %4 {offsets = [0, 512], sizes = [8, 256], strides = [1, 1]} : vector<8x768xf32> to vector<8x256xf32>
    %10 = arith.truncf %9 : vector<8x256xf32> to vector<8x256xbf16>
    %cst_6 = arith.constant 0.000000e+00 : f32
    %11 = vector.broadcast %cst_6 : f32 to vector<8x256xf32>
    %12 = vector.extract_strided_slice %6 {offsets = [0, 0], sizes = [8, 64], strides = [1, 1]} : vector<8x256xbf16> to vector<8x64xbf16>
    %13 = vector.extract_strided_slice %8 {offsets = [0, 0], sizes = [8, 64], strides = [1, 1]} : vector<8x256xbf16> to vector<8x64xbf16>
    %14 = vector.extract_strided_slice %10 {offsets = [0, 0], sizes = [8, 64], strides = [1, 1]} : vector<8x256xbf16> to vector<8x64xbf16>
    %cst_7 = arith.constant dense<0.000000e+00> : vector<8x8xf32>
    %15 = tpu.matmul %12, %13, %cst_7 {dimension_numbers = #tpu.dot_dimension_numbers<[1], [1], [0], [0], [0, 0, 1, 0], [], []>} : vector<8x64xbf16>, vector<8x64xbf16>, vector<8x8xf32> -> vector<8x8xf32>
    %cst_8 = arith.constant dense<0xFF800000> : vector<8xf32>
    %16 = vector.multi_reduction <maximumf>, %15, %cst_8 [1] : vector<8x8xf32> to vector<8xf32>
    %17 = vector.shape_cast %16 : vector<8xf32> to vector<8x1xf32>
    %18 = vector.broadcast %17 : vector<8x1xf32> to vector<8x8xf32>
    %19 = arith.subf %15, %18 : vector<8x8xf32>
    %20 = math.exp %19 : vector<8x8xf32>
    %cst_9 = arith.constant dense<0.000000e+00> : vector<8xf32>
    %21 = vector.multi_reduction <add>, %20, %cst_9 [1] : vector<8x8xf32> to vector<8xf32>
    %22 = vector.shape_cast %21 : vector<8xf32> to vector<8x1xf32>
    %23 = tpu.reciprocal %22 {approx = true} : vector<8x1xf32> -> vector<8x1xf32>
    %24 = vector.broadcast %23 : vector<8x1xf32> to vector<8x8xf32>
    %25 = arith.mulf %20, %24 : vector<8x8xf32>
    %26 = arith.truncf %25 : vector<8x8xf32> to vector<8x8xbf16>
    %cst_10 = arith.constant dense<0.000000e+00> : vector<8x64xf32>
    %27 = tpu.matmul %26, %14, %cst_10 {dimension_numbers = #tpu.dot_dimension_numbers<[1], [0], [0], [1], [0, 0, 1, 1], [], []>} : vector<8x8xbf16>, vector<8x64xbf16>, vector<8x64xf32> -> vector<8x64xf32>
    %28 = arith.truncf %27 : vector<8x64xf32> to vector<8x64xbf16>
    %29 = vector.extract_strided_slice %1 {offsets = [0, 0], sizes = [64, 256], strides = [1, 1]} : vector<256x256xbf16> to vector<64x256xbf16>
    %cst_11 = arith.constant dense<0.000000e+00> : vector<8x256xf32>
    %30 = tpu.matmul %28, %29, %cst_11 {dimension_numbers = #tpu.dot_dimension_numbers<[1], [0], [0], [1], [0, 0, 1, 1], [], []>} : vector<8x64xbf16>, vector<64x256xbf16>, vector<8x256xf32> -> vector<8x256xf32>
    %31 = arith.addf %11, %30 : vector<8x256xf32>
    %32 = vector.extract_strided_slice %6 {offsets = [0, 64], sizes = [8, 64], strides = [1, 1]} : vector<8x256xbf16> to vector<8x64xbf16>
    %33 = vector.extract_strided_slice %8 {offsets = [0, 64], sizes = [8, 64], strides = [1, 1]} : vector<8x256xbf16> to vector<8x64xbf16>
    %34 = vector.extract_strided_slice %10 {offsets = [0, 64], sizes = [8, 64], strides = [1, 1]} : vector<8x256xbf16> to vector<8x64xbf16>
    %cst_12 = arith.constant dense<0.000000e+00> : vector<8x8xf32>
    %35 = tpu.matmul %32, %33, %cst_12 {dimension_numbers = #tpu.dot_dimension_numbers<[1], [1], [0], [0], [0, 0, 1, 0], [], []>} : vector<8x64xbf16>, vector<8x64xbf16>, vector<8x8xf32> -> vector<8x8xf32>
    %cst_13 = arith.constant dense<0xFF800000> : vector<8xf32>
    %36 = vector.multi_reduction <maximumf>, %35, %cst_13 [1] : vector<8x8xf32> to vector<8xf32>
    %37 = vector.shape_cast %36 : vector<8xf32> to vector<8x1xf32>
    %38 = vector.broadcast %37 : vector<8x1xf32> to vector<8x8xf32>
    %39 = arith.subf %35, %38 : vector<8x8xf32>
    %40 = math.exp %39 : vector<8x8xf32>
    %cst_14 = arith.constant dense<0.000000e+00> : vector<8xf32>
    %41 = vector.multi_reduction <add>, %40, %cst_14 [1] : vector<8x8xf32> to vector<8xf32>
    %42 = vector.shape_cast %41 : vector<8xf32> to vector<8x1xf32>
    %43 = tpu.reciprocal %42 {approx = true} : vector<8x1xf32> -> vector<8x1xf32>
    %44 = vector.broadcast %43 : vector<8x1xf32> to vector<8x8xf32>
    %45 = arith.mulf %40, %44 : vector<8x8xf32>
    %46 = arith.truncf %45 : vector<8x8xf32> to vector<8x8xbf16>
    %cst_15 = arith.constant dense<0.000000e+00> : vector<8x64xf32>
    %47 = tpu.matmul %46, %34, %cst_15 {dimension_numbers = #tpu.dot_dimension_numbers<[1], [0], [0], [1], [0, 0, 1, 1], [], []>} : vector<8x8xbf16>, vector<8x64xbf16>, vector<8x64xf32> -> vector<8x64xf32>
    %48 = arith.truncf %47 : vector<8x64xf32> to vector<8x64xbf16>
    %49 = vector.extract_strided_slice %1 {offsets = [64, 0], sizes = [64, 256], strides = [1, 1]} : vector<256x256xbf16> to vector<64x256xbf16>
    %cst_16 = arith.constant dense<0.000000e+00> : vector<8x256xf32>
    %50 = tpu.matmul %48, %49, %cst_16 {dimension_numbers = #tpu.dot_dimension_numbers<[1], [0], [0], [1], [0, 0, 1, 1], [], []>} : vector<8x64xbf16>, vector<64x256xbf16>, vector<8x256xf32> -> vector<8x256xf32>
    %51 = arith.addf %31, %50 : vector<8x256xf32>
    %52 = vector.extract_strided_slice %6 {offsets = [0, 128], sizes = [8, 64], strides = [1, 1]} : vector<8x256xbf16> to vector<8x64xbf16>
    %53 = vector.extract_strided_slice %8 {offsets = [0, 128], sizes = [8, 64], strides = [1, 1]} : vector<8x256xbf16> to vector<8x64xbf16>
    %54 = vector.extract_strided_slice %10 {offsets = [0, 128], sizes = [8, 64], strides = [1, 1]} : vector<8x256xbf16> to vector<8x64xbf16>
    %cst_17 = arith.constant dense<0.000000e+00> : vector<8x8xf32>
    %55 = tpu.matmul %52, %53, %cst_17 {dimension_numbers = #tpu.dot_dimension_numbers<[1], [1], [0], [0], [0, 0, 1, 0], [], []>} : vector<8x64xbf16>, vector<8x64xbf16>, vector<8x8xf32> -> vector<8x8xf32>
    %cst_18 = arith.constant dense<0xFF800000> : vector<8xf32>
    %56 = vector.multi_reduction <maximumf>, %55, %cst_18 [1] : vector<8x8xf32> to vector<8xf32>
    %57 = vector.shape_cast %56 : vector<8xf32> to vector<8x1xf32>
    %58 = vector.broadcast %57 : vector<8x1xf32> to vector<8x8xf32>
    %59 = arith.subf %55, %58 : vector<8x8xf32>
    %60 = math.exp %59 : vector<8x8xf32>
    %cst_19 = arith.constant dense<0.000000e+00> : vector<8xf32>
    %61 = vector.multi_reduction <add>, %60, %cst_19 [1] : vector<8x8xf32> to vector<8xf32>
    %62 = vector.shape_cast %61 : vector<8xf32> to vector<8x1xf32>
    %63 = tpu.reciprocal %62 {approx = true} : vector<8x1xf32> -> vector<8x1xf32>
    %64 = vector.broadcast %63 : vector<8x1xf32> to vector<8x8xf32>
    %65 = arith.mulf %60, %64 : vector<8x8xf32>
    %66 = arith.truncf %65 : vector<8x8xf32> to vector<8x8xbf16>
    %cst_20 = arith.constant dense<0.000000e+00> : vector<8x64xf32>
    %67 = tpu.matmul %66, %54, %cst_20 {dimension_numbers = #tpu.dot_dimension_numbers<[1], [0], [0], [1], [0, 0, 1, 1], [], []>} : vector<8x8xbf16>, vector<8x64xbf16>, vector<8x64xf32> -> vector<8x64xf32>
    %68 = arith.truncf %67 : vector<8x64xf32> to vector<8x64xbf16>
    %69 = vector.extract_strided_slice %1 {offsets = [128, 0], sizes = [64, 256], strides = [1, 1]} : vector<256x256xbf16> to vector<64x256xbf16>
    %cst_21 = arith.constant dense<0.000000e+00> : vector<8x256xf32>
    %70 = tpu.matmul %68, %69, %cst_21 {dimension_numbers = #tpu.dot_dimension_numbers<[1], [0], [0], [1], [0, 0, 1, 1], [], []>} : vector<8x64xbf16>, vector<64x256xbf16>, vector<8x256xf32> -> vector<8x256xf32>
    %71 = arith.addf %51, %70 : vector<8x256xf32>
    %72 = vector.extract_strided_slice %6 {offsets = [0, 192], sizes = [8, 64], strides = [1, 1]} : vector<8x256xbf16> to vector<8x64xbf16>
    %73 = vector.extract_strided_slice %8 {offsets = [0, 192], sizes = [8, 64], strides = [1, 1]} : vector<8x256xbf16> to vector<8x64xbf16>
    %74 = vector.extract_strided_slice %10 {offsets = [0, 192], sizes = [8, 64], strides = [1, 1]} : vector<8x256xbf16> to vector<8x64xbf16>
    %cst_22 = arith.constant dense<0.000000e+00> : vector<8x8xf32>
    %75 = tpu.matmul %72, %73, %cst_22 {dimension_numbers = #tpu.dot_dimension_numbers<[1], [1], [0], [0], [0, 0, 1, 0], [], []>} : vector<8x64xbf16>, vector<8x64xbf16>, vector<8x8xf32> -> vector<8x8xf32>
    %cst_23 = arith.constant dense<0xFF800000> : vector<8xf32>
    %76 = vector.multi_reduction <maximumf>, %75, %cst_23 [1] : vector<8x8xf32> to vector<8xf32>
    %77 = vector.shape_cast %76 : vector<8xf32> to vector<8x1xf32>
    %78 = vector.broadcast %77 : vector<8x1xf32> to vector<8x8xf32>
    %79 = arith.subf %75, %78 : vector<8x8xf32>
    %80 = math.exp %79 : vector<8x8xf32>
    %cst_24 = arith.constant dense<0.000000e+00> : vector<8xf32>
    %81 = vector.multi_reduction <add>, %80, %cst_24 [1] : vector<8x8xf32> to vector<8xf32>
    %82 = vector.shape_cast %81 : vector<8xf32> to vector<8x1xf32>
    %83 = tpu.reciprocal %82 {approx = true} : vector<8x1xf32> -> vector<8x1xf32>
    %84 = vector.broadcast %83 : vector<8x1xf32> to vector<8x8xf32>
    %85 = arith.mulf %80, %84 : vector<8x8xf32>
    %86 = arith.truncf %85 : vector<8x8xf32> to vector<8x8xbf16>
    %cst_25 = arith.constant dense<0.000000e+00> : vector<8x64xf32>
    %87 = tpu.matmul %86, %74, %cst_25 {dimension_numbers = #tpu.dot_dimension_numbers<[1], [0], [0], [1], [0, 0, 1, 1], [], []>} : vector<8x8xbf16>, vector<8x64xbf16>, vector<8x64xf32> -> vector<8x64xf32>
    %88 = arith.truncf %87 : vector<8x64xf32> to vector<8x64xbf16>
    %89 = vector.extract_strided_slice %1 {offsets = [192, 0], sizes = [64, 256], strides = [1, 1]} : vector<256x256xbf16> to vector<64x256xbf16>
    %cst_26 = arith.constant dense<0.000000e+00> : vector<8x256xf32>
    %90 = tpu.matmul %88, %89, %cst_26 {dimension_numbers = #tpu.dot_dimension_numbers<[1], [0], [0], [1], [0, 0, 1, 1], [], []>} : vector<8x64xbf16>, vector<64x256xbf16>, vector<8x256xf32> -> vector<8x256xf32>
    %91 = arith.addf %71, %90 : vector<8x256xf32>
    %c0_27 = arith.constant 0 : index
    %c0_28 = arith.constant 0 : index
    %c0_29 = arith.constant 0 : index
    %92 = vector.load %arg4[%c0_27, %c0_28, %c0_29] : memref<1x8x256xf32, #tpu.memory_space<vmem>>, vector<1x8x256xf32>
    %93 = vector.shape_cast %92 : vector<1x8x256xf32> to vector<8x256xf32>
    %94 = vector.shape_cast %91 : vector<8x256xf32> to vector<1x8x256xf32>
    tpu.vector_store %arg4[%c0_27, %c0_28, %c0_29], %94 {strides = array<i32>} : memref<1x8x256xf32, #tpu.memory_space<vmem>>, vector<1x8x256xf32>,
    return
  }
  func.func @transform_0(%arg0: i32) -> (i32, i32, i32) {
    %c0_i32 = arith.constant 0 : i32
    %c0_i32_0 = arith.constant 0 : i32
    %c0_i32_1 = arith.constant 0 : i32
    return %arg0, %c0_i32, %c0_i32_0 : i32, i32, i32
  }
  func.func @transform_1(%arg0: i32) -> (i32, i32) {
    %c0_i32 = arith.constant 0 : i32
    %c0_i32_0 = arith.constant 0 : i32
    %c0_i32_1 = arith.constant 0 : i32
    return %c0_i32, %c0_i32_0 : i32, i32
  }
  func.func @transform_2(%arg0: i32) -> (i32, i32) {
    %c0_i32 = arith.constant 0 : i32
    %c0_i32_0 = arith.constant 0 : i32
    %c0_i32_1 = arith.constant 0 : i32
    return %c0_i32, %c0_i32_0 : i32, i32
  }
  func.func @transform_3(%arg0: i32) -> (i32, i32, i32) {
    %c0_i32 = arith.constant 0 : i32
    %c0_i32_0 = arith.constant 0 : i32
    %c0_i32_1 = arith.constant 0 : i32
    return %arg0, %c0_i32, %c0_i32_0 : i32, i32, i32
  }
}

</mosaic_0001>

<llo_original>
// kernel: tpu_custom_call.1
$region0: #{tpu_custom_call.1}
  #allocation0 [shape = 'u32[]', space=smem, size = 0x4, offset = 0x4, fixed_abs, tag = 'smem constant byte address 0x4 - core index']
  #allocation1 [shape = 'u32[144,128]{1,0:T(1,128)}', space=vmem, size = 0x12000, scoped, tag = 'internal scratch']
  %s0 = inlined_call_operand.hbm [shape: bf16[2,8,256], index: 0, kind: input, shape index: {}]
  %s1 = inlined_call_operand.hbm [shape: bf16[256,768], index: 1, kind: input, shape index: {}]
  %s2 = inlined_call_operand.hbm [shape: bf16[256,256], index: 2, kind: input, shape index: {}]
  %s3 = inlined_call_operand.hbm [shape: f32[2,8,256], index: 3, kind: output, shape index: {}]
  %s4 = sld [smem:[#allocation0]]
  $region57: #{tpu_custom_call.1} parent=0
    _
  %s6 = ssub.s32 1, %s4
  %s7 = scalar_select 0, %s6, %s4
  $region1: #{tpu_custom_call.1} parent=0
    #allocation2 [shape = 'u8[8192]{0}', space=vmem, size = 0x2000, scoped, tag = 'input window, operand 0']
    #allocation3 [shape = 's32[2]{0}', space=sflag, size = 0x8, scoped, tag = 'scoped memory for tpu_custom_call.1']
    #allocation4 [shape = 's32[2]{0}', space=sflag, size = 0x8, scoped, tag = 'scoped memory for tpu_custom_call.1']
    #allocation5 [shape = 'u8[393216]{0}', space=vmem, size = 0x60000, scoped, tag = 'input window, operand 1, single buffered']
    #allocation6 [shape = 's32[1]{0}', space=sflag, size = 0x4, scoped, tag = 'scoped memory for tpu_custom_call.1']
    #allocation7 [shape = 'u8[131072]{0}', space=vmem, size = 0x20000, scoped, tag = 'input window, operand 2, single buffered']
    #allocation8 [shape = 'u8[16384]{0}', space=vmem, size = 0x4000, scoped, tag = 'output window, operand 0']
    %8 = vsyncpa [#allocation3], 0
    %s9 = scalar_lea.sflag [#allocation3], 1
    %10 = vsyncpa %s9, 0
    %11 = vsyncpa [#allocation6], 0
    %12 = vsyncpa [#allocation4], 0
    %s13 = scalar_lea.sflag [#allocation4], 1
    %14 = vsyncpa %s13, 0
    loop: start=0, step=1, limit=4
    $region2: #{tpu_custom_call.1} parent=1 // loop_pre_header
      _
    $region3: #{tpu_custom_call.1} parent=1 // loop_header
      %s16 = sphi 0, %s20
      %p17 = scmp.ge.s32.totalorder %s16, 4
      %s26 = sphi 0, %s28
      %s29 = sphi 0, %s26
      %s30 = sphi 0, %s29
      %s46 = sphi 0, %s30
      %s50 = sphi 0, %s50
      %s52 = sphi 0, %s50
      %s53 = sphi 0, %s52
      %s67 = sphi 0, %s53
      %s71 = sphi 0, %s71
      %s73 = sphi 0, %s71
      %s74 = sphi 0, %s73
      %s88 = sphi 0, %s74
      %s94 = sphi 0, %s96
      %s97 = sphi 0, %s94
      %s98 = sphi 0, %s97
      %s114 = sphi 0, %s98
    $region4: #{tpu_custom_call.1} parent=1 // loop_header_branch
      %19 = sbr.rel (%p17) target = $region8
    $region5: #{tpu_custom_call.1} parent=1 // loop_body
      %s21 = ssub.s32 %s16, 1
      %s22 = ssub.s32 %s16, 2
      %s23 = sadd.s32 %s16, 1
      %s24 = ssub.s32 %s16, %s23
      %p25 = scmp.eq.s32.totalorder %s24, 0
      %s27 = sadd.s32 %s26, 1
      %s28 = scalar_select %p25, %s26, %s27
      %p31 = pneg %p25
      %p32 = scmp.eq.s32.totalorder %s16, 1
      %p33 = por %p31, %p32
      %p34 = scmp.ne.s32.totalorder %s26, %s29
      %p35 = scmp.eq.s32.totalorder %s16, 0
      %p36 = por %p34, %p35
      %p37 = scmp.ne.s32.totalorder %s26, %s29
      %p38 = scmp.eq.s32.totalorder %s21, 1
      %p39 = por %p37, %p38
      %p40 = scmp.ne.s32.totalorder %s29, %s30
      %p41 = scmp.eq.s32.totalorder %s21, 0
      %p42 = por %p40, %p41
      %p43 = scmp.ne.s32.totalorder %s29, %s30
      %p44 = scmp.eq.s32.totalorder %s22, 1
      %p45 = por %p43, %p44
      %p47 = scmp.ne.s32.totalorder %s30, %s46
      %p48 = scmp.eq.s32.totalorder %s22, 0
      %p49 = por %p47, %p48
      %s51 = sadd.s32 %s50, 1
      %p54 = scmp.eq.s32.totalorder %s16, 1
      %p55 = scmp.ne.s32.totalorder %s50, %s52
      %p56 = scmp.eq.s32.totalorder %s16, 0
      %p57 = por %p55, %p56
      %p58 = scmp.ne.s32.totalorder %s50, %s52
      %p59 = scmp.eq.s32.totalorder %s21, 1
      %p60 = por %p58, %p59
      %p61 = scmp.ne.s32.totalorder %s52, %s53
      %p62 = scmp.eq.s32.totalorder %s21, 0
      %p63 = por %p61, %p62
      %p64 = scmp.ne.s32.totalorder %s52, %s53
      %p65 = scmp.eq.s32.totalorder %s22, 1
      %p66 = por %p64, %p65
      %p68 = scmp.ne.s32.totalorder %s53, %s67
      %p69 = scmp.eq.s32.totalorder %s22, 0
      %p70 = por %p68, %p69
      %s72 = sadd.s32 %s71, 1
      %p75 = scmp.eq.s32.totalorder %s16, 1
      %p76 = scmp.ne.s32.totalorder %s71, %s73
      %p77 = scmp.eq.s32.totalorder %s16, 0
      %p78 = por %p76, %p77
      %p79 = scmp.ne.s32.totalorder %s71, %s73
      %p80 = scmp.eq.s32.totalorder %s21, 1
      %p81 = por %p79, %p80
      %p82 = scmp.ne.s32.totalorder %s73, %s74
      %p83 = scmp.eq.s32.totalorder %s21, 0
      %p84 = por %p82, %p83
      %p85 = scmp.ne.s32.totalorder %s73, %s74
      %p86 = scmp.eq.s32.totalorder %s22, 1
      %p87 = por %p85, %p86
      %p89 = scmp.ne.s32.totalorder %s74, %s88
      %p90 = scmp.eq.s32.totalorder %s22, 0
      %p91 = por %p89, %p90
      %s92 = ssub.s32 %s16, %s23
      %p93 = scmp.eq.s32.totalorder %s92, 0
      %s95 = sadd.s32 %s94, 1
      %s96 = scalar_select %p93, %s94, %s95
      %p99 = pneg %p93
      %p100 = scmp.eq.s32.totalorder %s16, 1
      %p101 = por %p99, %p100
      %p102 = scmp.ne.s32.totalorder %s94, %s97
      %p103 = scmp.eq.s32.totalorder %s16, 0
      %p104 = por %p102, %p103
      %p105 = scmp.ne.s32.totalorder %s94, %s97
      %p106 = scmp.eq.s32.totalorder %s21, 1
      %p107 = por %p105, %p106
      %p108 = scmp.ne.s32.totalorder %s97, %s98
      %p109 = scmp.eq.s32.totalorder %s21, 0
      %p110 = por %p108, %p109
      %p111 = scmp.ne.s32.totalorder %s97, %s98
      %p112 = scmp.eq.s32.totalorder %s22, 1
      %p113 = por %p111, %p112
      %p115 = scmp.ne.s32.totalorder %s98, %s114
      %p116 = scmp.eq.s32.totalorder %s22, 0
      %p117 = por %p115, %p116
      %p118 = scmp.le.s32.totalorder 1, %s16
      %p119 = scmp.lt.s32.totalorder %s16, 3
      %p120 = pnand %p118, %p119
      %p121 = pneg %p120
      // Predicated region
      $region9: #{tpu_custom_call.1} parent=5 // pred_check
        _
      $region10: #{tpu_custom_call.1} parent=5 // pred_check_branch
        %123 = sbr.rel (%p120) target = $region12
      $region11: #{tpu_custom_call.1} parent=5 // pred_region
        %s124 = ssub.s32 %s16, 1
        // Predicated region
        $region13: #{tpu_custom_call.1} parent=11 // pred_check
          %p125 = pneg %p63
        $region14: #{tpu_custom_call.1} parent=11 // pred_check_branch
          %127 = sbr.rel (%p125) target = $region16
        $region15: #{tpu_custom_call.1} parent=11 // pred_region
          %s129 = ssub.s32 12288, 12288
          %130 = vsyncadd [#allocation6], %s129
          %s131 = sshll.u32 [#allocation5], 4
          %s132 = int_to_ptr.vmem [resolvable:$true] %s131
          %137 = dma.hbm_to_vmem [thread:$0]  %s1, 12288, %s132, [#allocation6], 384, 384, 24
        $region16: #{tpu_custom_call.1} parent=11 // pred_fallthru
          _
        // Predicated region
        $region17: #{tpu_custom_call.1} parent=11 // pred_check
          %p138 = pneg %p84
        $region18: #{tpu_custom_call.1} parent=11 // pred_check_branch
          %140 = sbr.rel (%p138) target = $region20
        $region19: #{tpu_custom_call.1} parent=11 // pred_region
          %s142 = ssub.s32 4096, 4096
          %143 = vsyncadd [#allocation6], %s142
          %s144 = sshll.u32 [#allocation7], 4
          %s145 = int_to_ptr.vmem [resolvable:$true] %s144
          %150 = dma.hbm_to_vmem [thread:$0]  %s2, 4096, %s145, [#allocation6], 128, 128, 8
        $region20: #{tpu_custom_call.1} parent=11 // pred_fallthru
          _
      $region12: #{tpu_custom_call.1} parent=5 // pred_fallthru
        _
      %p151 = scmp.lt.s32.totalorder %s16, 2
      // Predicated region
      $region21: #{tpu_custom_call.1} parent=5 // pred_check
        %p152 = pneg %p151
      $region22: #{tpu_custom_call.1} parent=5 // pred_check_branch
        %154 = sbr.rel (%p152) target = $region24
      $region23: #{tpu_custom_call.1} parent=5 // pred_region
        // Predicated region
        $region25: #{tpu_custom_call.1} parent=23 // pred_check
          %p155 = pneg %p36
        $region26: #{tpu_custom_call.1} parent=23 // pred_check_branch
          %157 = sbr.rel (%p155) target = $region28
        $region27: #{tpu_custom_call.1} parent=23 // pred_region
          %s158 = sand.u32 %s26, 1
          %s159 = scalar_lea.sflag [#allocation3], %s158
          %s160 = sand.u32 %s26, 1
          %s161 = smul.addr %s160, 8
          %s162 = scalar_lea.vmem [#allocation2], %s161
          %s164 = ssub.s32 128, 128
          %165 = vsyncadd %s159, %s164
          %s166 = smul.addr %s16, 2
          %s167 = smul.addr %s166, 64
          %s168 = scalar_lea.hbm %s0, %s167
          %s170 = sshll.u32 %s162, 4
          %s171 = int_to_ptr.vmem [resolvable:$true] %s170
          %173 = dma.hbm_to_vmem [thread:$0]  %s168, 128, %s171, %s159
        $region28: #{tpu_custom_call.1} parent=23 // pred_fallthru
          _
      $region24: #{tpu_custom_call.1} parent=5 // pred_fallthru
        _
      %p174 = scmp.le.s32.totalorder 1, %s16
      %p175 = scmp.lt.s32.totalorder %s16, 3
      %p176 = pnand %p174, %p175
      %p177 = pneg %p176
      // Predicated region
      $region29: #{tpu_custom_call.1} parent=5 // pred_check
        _
      $region30: #{tpu_custom_call.1} parent=5 // pred_check_branch
        %179 = sbr.rel (%p176) target = $region32
      $region31: #{tpu_custom_call.1} parent=5 // pred_region
        %s180 = ssub.s32 %s16, 1
        %s181 = sand.u32 %s29, 1
        %s182 = scalar_lea.sflag [#allocation3], %s181
        %s183 = sand.u32 %s29, 1
        %s184 = smul.addr %s183, 8
        %s185 = scalar_lea.vmem [#allocation2], %s184
        // Predicated region
        $region33: #{tpu_custom_call.1} parent=31 // pred_check
          %p186 = pneg %p42
        $region34: #{tpu_custom_call.1} parent=31 // pred_check_branch
          %188 = sbr.rel (%p186) target = $region36
        $region35: #{tpu_custom_call.1} parent=31 // pred_region
          %189 = dma.done %s182, 128
        $region36: #{tpu_custom_call.1} parent=31 // pred_fallthru
          _
        // Predicated region
        $region37: #{tpu_custom_call.1} parent=31 // pred_check
          %p190 = pneg %p63
        $region38: #{tpu_custom_call.1} parent=31 // pred_check_branch
          %192 = sbr.rel (%p190) target = $region40
        $region39: #{tpu_custom_call.1} parent=31 // pred_region
          %193 = dma.done [#allocation6], 12288
        $region40: #{tpu_custom_call.1} parent=31 // pred_fallthru
          _
        // Predicated region
        $region41: #{tpu_custom_call.1} parent=31 // pred_check
          %p194 = pneg %p84
        $region42: #{tpu_custom_call.1} parent=31 // pred_check_branch
          %196 = sbr.rel (%p194) target = $region44
        $region43: #{tpu_custom_call.1} parent=31 // pred_region
          %197 = dma.done [#allocation6], 4096
        $region44: #{tpu_custom_call.1} parent=31 // pred_fallthru
          _
        %s198 = sand.u32 %s29, 1
        %s199 = scalar_lea.sflag [#allocation3], %s198
        %s200 = sand.u32 %s29, 1
        %s201 = smul.addr %s200, 8
        %s202 = scalar_lea.vmem [#allocation2], %s201
        %p203 = pneg %p42
        %p204 = pneg %p39
        %p205 = pneg %p63
        %p206 = pneg %p60
        %p207 = pneg %p84
        %p208 = pneg %p81
        %p209 = pneg %p110
        %p210 = pneg %p107
        %s211 = sand.u32 %s97, 1
        %s212 = scalar_lea.sflag [#allocation4], %s211
        %s213 = sand.u32 %s97, 1
        %s214 = smul.addr %s213, 16
        %s215 = scalar_lea.vmem [#allocation8], %s214
        %v217 = vld [vmem:[#allocation5] sm:$0xff]
        %v218 = vld [vmem:[#allocation5 + $0x8] sm:$0xff]
        %v219 = vld [vmem:[#allocation5 + $0x10] sm:$0xff]
        %v220 = vld [vmem:[#allocation5 + $0x18] sm:$0xff]
        %v221 = vld [vmem:[#allocation5 + $0x20] sm:$0xff]
        %v222 = vld [vmem:[#allocation5 + $0x28] sm:$0xff]
        %v223 = vld [vmem:[#allocation5 + $0x30] sm:$0xff]
        %v224 = vld [vmem:[#allocation5 + $0x38] sm:$0xff]
        %v225 = vld [vmem:[#allocation5 + $0x40] sm:$0xff]
        %v226 = vld [vmem:[#allocation5 + $0x48] sm:$0xff]
        %v227 = vld [vmem:[#allocation5 + $0x50] sm:$0xff]
        %v228 = vld [vmem:[#allocation5 + $0x58] sm:$0xff]
        %v229 = vld [vmem:[#allocation5 + $0x60] sm:$0xff]
        %v230 = vld [vmem:[#allocation5 + $0x68] sm:$0xff]
        %v231 = vld [vmem:[#allocation5 + $0x70] sm:$0xff]
        %v232 = vld [vmem:[#allocation5 + $0x78] sm:$0xff]
        %v233 = vld [vmem:[#allocation5 + $0x80] sm:$0xff]
        %v234 = vld [vmem:[#allocation5 + $0x88] sm:$0xff]
        %v235 = vld [vmem:[#allocation5 + $0x90] sm:$0xff]
        %v236 = vld [vmem:[#allocation5 + $0x98] sm:$0xff]
        %v237 = vld [vmem:[#allocation5 + $0xa0] sm:$0xff]
        %v238 = vld [vmem:[#allocation5 + $0xa8] sm:$0xff]
        %v239 = vld [vmem:[#allocation5 + $0xb0] sm:$0xff]
        %v240 = vld [vmem:[#allocation5 + $0xb8] sm:$0xff]
        %v241 = vld [vmem:[#allocation5 + $0xc0] sm:$0xff]
        %v242 = vld [vmem:[#allocation5 + $0xc8] sm:$0xff]
        %v243 = vld [vmem:[#allocation5 + $0xd0] sm:$0xff]
        %v244 = vld [vmem:[#allocation5 + $0xd8] sm:$0xff]
        %v245 = vld [vmem:[#allocation5 + $0xe0] sm:$0xff]
        %v246 = vld [vmem:[#allocation5 + $0xe8] sm:$0xff]
        %v247 = vld [vmem:[#allocation5 + $0xf0] sm:$0xff]
        %v248 = vld [vmem:[#allocation5 + $0xf8] sm:$0xff]
        %v249 = vld [vmem:[#allocation5 + $0x100] sm:$0xff]
        %v250 = vld [vmem:[#allocation5 + $0x108] sm:$0xff]
        %v251 = vld [vmem:[#allocation5 + $0x110] sm:$0xff]
        %v252 = vld [vmem:[#allocation5 + $0x118] sm:$0xff]
        %v253 = vld [vmem:[#allocation5 + $0x120] sm:$0xff]
        %v254 = vld [vmem:[#allocation5 + $0x128] sm:$0xff]
        %v255 = vld [vmem:[#allocation5 + $0x130] sm:$0xff]
        %v256 = vld [vmem:[#allocation5 + $0x138] sm:$0xff]
        %v257 = vld [vmem:[#allocation5 + $0x140] sm:$0xff]
        %v258 = vld [vmem:[#allocation5 + $0x148] sm:$0xff]
        %v259 = vld [vmem:[#allocation5 + $0x150] sm:$0xff]
        %v260 = vld [vmem:[#allocation5 + $0x158] sm:$0xff]
        %v261 = vld [vmem:[#allocation5 + $0x160] sm:$0xff]
        %v262 = vld [vmem:[#allocation5 + $0x168] sm:$0xff]
        %v263 = vld [vmem:[#allocation5 + $0x170] sm:$0xff]
        %v264 = vld [vmem:[#allocation5 + $0x178] sm:$0xff]
        %v265 = vld [vmem:[#allocation5 + $0x180] sm:$0xff]
        %v266 = vld [vmem:[#allocation5 + $0x188] sm:$0xff]
        %v267 = vld [vmem:[#allocation5 + $0x190] sm:$0xff]
        %v268 = vld [vmem:[#allocation5 + $0x198] sm:$0xff]
        %v269 = vld [vmem:[#allocation5 + $0x1a0] sm:$0xff]
        %v270 = vld [vmem:[#allocation5 + $0x1a8] sm:$0xff]
        %v271 = vld [vmem:[#allocation5 + $0x1b0] sm:$0xff]
        %v272 = vld [vmem:[#allocation5 + $0x1b8] sm:$0xff]
        %v273 = vld [vmem:[#allocation5 + $0x1c0] sm:$0xff]
        %v274 = vld [vmem:[#allocation5 + $0x1c8] sm:$0xff]
        %v275 = vld [vmem:[#allocation5 + $0x1d0] sm:$0xff]
        %v276 = vld [vmem:[#allocation5 + $0x1d8] sm:$0xff]
        %v277 = vld [vmem:[#allocation5 + $0x1e0] sm:$0xff]
        %v278 = vld [vmem:[#allocation5 + $0x1e8] sm:$0xff]
        %v279 = vld [vmem:[#allocation5 + $0x1f0] sm:$0xff]
        %v280 = vld [vmem:[#allocation5 + $0x1f8] sm:$0xff]
        %v281 = vld [vmem:[#allocation5 + $0x200] sm:$0xff]
        %v282 = vld [vmem:[#allocation5 + $0x208] sm:$0xff]
        %v283 = vld [vmem:[#allocation5 + $0x210] sm:$0xff]
        %v284 = vld [vmem:[#allocation5 + $0x218] sm:$0xff]
        %v285 = vld [vmem:[#allocation5 + $0x220] sm:$0xff]
        %v286 = vld [vmem:[#allocation5 + $0x228] sm:$0xff]
        %v287 = vld [vmem:[#allocation5 + $0x230] sm:$0xff]
        %v288 = vld [vmem:[#allocation5 + $0x238] sm:$0xff]
        %v289 = vld [vmem:[#allocation5 + $0x240] sm:$0xff]
        %v290 = vld [vmem:[#allocation5 + $0x248] sm:$0xff]
        %v291 = vld [vmem:[#allocation5 + $0x250] sm:$0xff]
        %v292 = vld [vmem:[#allocation5 + $0x258] sm:$0xff]
        %v293 = vld [vmem:[#allocation5 + $0x260] sm:$0xff]
        %v294 = vld [vmem:[#allocation5 + $0x268] sm:$0xff]
        %v295 = vld [vmem:[#allocation5 + $0x270] sm:$0xff]
        %v296 = vld [vmem:[#allocation5 + $0x278] sm:$0xff]
        %v297 = vld [vmem:[#allocation5 + $0x280] sm:$0xff]
        %v298 = vld [vmem:[#allocation5 + $0x288] sm:$0xff]
        %v299 = vld [vmem:[#allocation5 + $0x290] sm:$0xff]
        %v300 = vld [vmem:[#allocation5 + $0x298] sm:$0xff]
        %v301 = vld [vmem:[#allocation5 + $0x2a0] sm:$0xff]
        %v302 = vld [vmem:[#allocation5 + $0x2a8] sm:$0xff]
        %v303 = vld [vmem:[#allocation5 + $0x2b0] sm:$0xff]
        %v304 = vld [vmem:[#allocation5 + $0x2b8] sm:$0xff]
        %v305 = vld [vmem:[#allocation5 + $0x2c0] sm:$0xff]
        %v306 = vld [vmem:[#allocation5 + $0x2c8] sm:$0xff]
        %v307 = vld [vmem:[#allocation5 + $0x2d0] sm:$0xff]
        %v308 = vld [vmem:[#allocation5 + $0x2d8] sm:$0xff]
        %v309 = vld [vmem:[#allocation5 + $0x2e0] sm:$0xff]
        %v310 = vld [vmem:[#allocation5 + $0x2e8] sm:$0xff]
        %v311 = vld [vmem:[#allocation5 + $0x2f0] sm:$0xff]
        %v312 = vld [vmem:[#allocation5 + $0x2f8] sm:$0xff]
        %v313 = vld [vmem:[#allocation7] sm:$0xff]
        %v314 = vld [vmem:[#allocation7 + $0x8] sm:$0xff]
        %v315 = vld [vmem:[#allocation7 + $0x10] sm:$0xff]
        %v316 = vld [vmem:[#allocation7 + $0x18] sm:$0xff]
        %v317 = vld [vmem:[#allocation7 + $0x20] sm:$0xff]
        %v318 = vld [vmem:[#allocation7 + $0x28] sm:$0xff]
        %v319 = vld [vmem:[#allocation7 + $0x30] sm:$0xff]
        %v320 = vld [vmem:[#allocation7 + $0x38] sm:$0xff]
        %v321 = vld [vmem:[#allocation7 + $0x40] sm:$0xff]
        %v322 = vld [vmem:[#allocation7 + $0x48] sm:$0xff]
        %v323 = vld [vmem:[#allocation7 + $0x50] sm:$0xff]
        %v324 = vld [vmem:[#allocation7 + $0x58] sm:$0xff]
        %v325 = vld [vmem:[#allocation7 + $0x60] sm:$0xff]
        %v326 = vld [vmem:[#allocation7 + $0x68] sm:$0xff]
        %v327 = vld [vmem:[#allocation7 + $0x70] sm:$0xff]
        %v328 = vld [vmem:[#allocation7 + $0x78] sm:$0xff]
        %v329 = vld [vmem:[#allocation7 + $0x80] sm:$0xff]
        %v330 = vld [vmem:[#allocation7 + $0x88] sm:$0xff]
        %v331 = vld [vmem:[#allocation7 + $0x90] sm:$0xff]
        %v332 = vld [vmem:[#allocation7 + $0x98] sm:$0xff]
        %v333 = vld [vmem:[#allocation7 + $0xa0] sm:$0xff]
        %v334 = vld [vmem:[#allocation7 + $0xa8] sm:$0xff]
        %v335 = vld [vmem:[#allocation7 + $0xb0] sm:$0xff]
        %v336 = vld [vmem:[#allocation7 + $0xb8] sm:$0xff]
        %v337 = vld [vmem:[#allocation7 + $0xc0] sm:$0xff]
        %v338 = vld [vmem:[#allocation7 + $0xc8] sm:$0xff]
        %v339 = vld [vmem:[#allocation7 + $0xd0] sm:$0xff]
        %v340 = vld [vmem:[#allocation7 + $0xd8] sm:$0xff]
        %v341 = vld [vmem:[#allocation7 + $0xe0] sm:$0xff]
        %v342 = vld [vmem:[#allocation7 + $0xe8] sm:$0xff]
        %v343 = vld [vmem:[#allocation7 + $0xf0] sm:$0xff]
        %v344 = vld [vmem:[#allocation7 + $0xf8] sm:$0xff]
        %v345 = vld [vmem:[%s185] sm:$0xff]
        %v347 = vunpack.c.l.b16 %v345
        %v348 = vunpack.c.h.b16 %v345
        %v349 = vpack.c.b16 %v347, %v347
        %v350 = vpack.c.b16 %v348, %v348
        %v449 = vunpack.c.l.b16 %v217
        %v450 = vunpack.c.h.b16 %v217
        %v451 = vunpack.c.l.b16 %v218
        %v452 = vunpack.c.h.b16 %v218
        %v453 = vunpack.c.l.b16 %v219
        %v454 = vunpack.c.h.b16 %v219
        %v455 = vunpack.c.l.b16 %v220
        %v456 = vunpack.c.h.b16 %v220
        %v457 = vunpack.c.l.b16 %v221
        %v458 = vunpack.c.h.b16 %v221
        %v459 = vunpack.c.l.b16 %v222
        %v460 = vunpack.c.h.b16 %v222
        %v461 = vunpack.c.l.b16 %v223
        %v462 = vunpack.c.h.b16 %v223
        %v463 = vunpack.c.l.b16 %v224
        %v464 = vunpack.c.h.b16 %v224
        %v465 = vunpack.c.l.b16 %v225
        %v466 = vunpack.c.h.b16 %v225
        %v467 = vunpack.c.l.b16 %v226
        %v468 = vunpack.c.h.b16 %v226
        %v469 = vunpack.c.l.b16 %v227
        %v470 = vunpack.c.h.b16 %v227
        %v471 = vunpack.c.l.b16 %v228
        %v472 = vunpack.c.h.b16 %v228
        %v473 = vunpack.c.l.b16 %v229
        %v474 = vunpack.c.h.b16 %v229
        %v475 = vunpack.c.l.b16 %v230
        %v476 = vunpack.c.h.b16 %v230
        %v477 = vunpack.c.l.b16 %v231
        %v478 = vunpack.c.h.b16 %v231
        %v479 = vunpack.c.l.b16 %v232
        %v480 = vunpack.c.h.b16 %v232
        %v481 = vunpack.c.l.b16 %v233
        %v482 = vunpack.c.h.b16 %v233
        %v483 = vunpack.c.l.b16 %v234
        %v484 = vunpack.c.h.b16 %v234
        %v485 = vunpack.c.l.b16 %v235
        %v486 = vunpack.c.h.b16 %v235
        %v487 = vunpack.c.l.b16 %v236
        %v488 = vunpack.c.h.b16 %v236
        %v489 = vunpack.c.l.b16 %v237
        %v490 = vunpack.c.h.b16 %v237
        %v491 = vunpack.c.l.b16 %v238
        %v492 = vunpack.c.h.b16 %v238
        %v493 = vunpack.c.l.b16 %v239
        %v494 = vunpack.c.h.b16 %v239
        %v495 = vunpack.c.l.b16 %v240
        %v496 = vunpack.c.h.b16 %v240
        %v497 = vunpack.c.l.b16 %v241
        %v498 = vunpack.c.h.b16 %v241
        %v499 = vunpack.c.l.b16 %v242
        %v500 = vunpack.c.h.b16 %v242
        %v501 = vunpack.c.l.b16 %v243
        %v502 = vunpack.c.h.b16 %v243
        %v503 = vunpack.c.l.b16 %v244
        %v504 = vunpack.c.h.b16 %v244
        %v505 = vunpack.c.l.b16 %v245
        %v506 = vunpack.c.h.b16 %v245
        %v507 = vunpack.c.l.b16 %v246
        %v508 = vunpack.c.h.b16 %v246
        %v509 = vunpack.c.l.b16 %v247
        %v510 = vunpack.c.h.b16 %v247
        %v511 = vunpack.c.l.b16 %v248
        %v512 = vunpack.c.h.b16 %v248
        %v513 = vunpack.c.l.b16 %v249
        %v514 = vunpack.c.h.b16 %v249
        %v515 = vunpack.c.l.b16 %v250
        %v516 = vunpack.c.h.b16 %v250
        %v517 = vunpack.c.l.b16 %v251
        %v518 = vunpack.c.h.b16 %v251
        %v519 = vunpack.c.l.b16 %v252
        %v520 = vunpack.c.h.b16 %v252
        %v521 = vunpack.c.l.b16 %v253
        %v522 = vunpack.c.h.b16 %v253
        %v523 = vunpack.c.l.b16 %v254
        %v524 = vunpack.c.h.b16 %v254
        %v525 = vunpack.c.l.b16 %v255
        %v526 = vunpack.c.h.b16 %v255
        %v527 = vunpack.c.l.b16 %v256
        %v528 = vunpack.c.h.b16 %v256
        %v529 = vunpack.c.l.b16 %v257
        %v530 = vunpack.c.h.b16 %v257
        %v531 = vunpack.c.l.b16 %v258
        %v532 = vunpack.c.h.b16 %v258
        %v533 = vunpack.c.l.b16 %v259
        %v534 = vunpack.c.h.b16 %v259
        %v535 = vunpack.c.l.b16 %v260
        %v536 = vunpack.c.h.b16 %v260
        %v537 = vunpack.c.l.b16 %v261
        %v538 = vunpack.c.h.b16 %v261
        %v539 = vunpack.c.l.b16 %v262
        %v540 = vunpack.c.h.b16 %v262
        %v541 = vunpack.c.l.b16 %v263
        %v542 = vunpack.c.h.b16 %v263
        %v543 = vunpack.c.l.b16 %v264
        %v544 = vunpack.c.h.b16 %v264
        %v545 = vunpack.c.l.b16 %v265
        %v546 = vunpack.c.h.b16 %v265
        %v547 = vunpack.c.l.b16 %v266
        %v548 = vunpack.c.h.b16 %v266
        %v549 = vunpack.c.l.b16 %v267
        %v550 = vunpack.c.h.b16 %v267
        %v551 = vunpack.c.l.b16 %v268
        %v552 = vunpack.c.h.b16 %v268
        %v553 = vunpack.c.l.b16 %v269
        %v554 = vunpack.c.h.b16 %v269
        %v555 = vunpack.c.l.b16 %v270
        %v556 = vunpack.c.h.b16 %v270
        %v557 = vunpack.c.l.b16 %v271
        %v558 = vunpack.c.h.b16 %v271
        %v559 = vunpack.c.l.b16 %v272
        %v560 = vunpack.c.h.b16 %v272
        %v561 = vunpack.c.l.b16 %v273
        %v562 = vunpack.c.h.b16 %v273
        %v563 = vunpack.c.l.b16 %v274
        %v564 = vunpack.c.h.b16 %v274
        %v565 = vunpack.c.l.b16 %v275
        %v566 = vunpack.c.h.b16 %v275
        %v567 = vunpack.c.l.b16 %v276
        %v568 = vunpack.c.h.b16 %v276
        %v569 = vunpack.c.l.b16 %v277
        %v570 = vunpack.c.h.b16 %v277
        %v571 = vunpack.c.l.b16 %v278
        %v572 = vunpack.c.h.b16 %v278
        %v573 = vunpack.c.l.b16 %v279
        %v574 = vunpack.c.h.b16 %v279
        %v575 = vunpack.c.l.b16 %v280
        %v576 = vunpack.c.h.b16 %v280
        %v577 = vunpack.c.l.b16 %v281
        %v578 = vunpack.c.h.b16 %v281
        %v579 = vunpack.c.l.b16 %v282
        %v580 = vunpack.c.h.b16 %v282
        %v581 = vunpack.c.l.b16 %v283
        %v582 = vunpack.c.h.b16 %v283
        %v583 = vunpack.c.l.b16 %v284
        %v584 = vunpack.c.h.b16 %v284
        %v585 = vunpack.c.l.b16 %v285
        %v586 = vunpack.c.h.b16 %v285
        %v587 = vunpack.c.l.b16 %v286
        %v588 = vunpack.c.h.b16 %v286
        %v589 = vunpack.c.l.b16 %v287
        %v590 = vunpack.c.h.b16 %v287
        %v591 = vunpack.c.l.b16 %v288
        %v592 = vunpack.c.h.b16 %v288
        %v593 = vunpack.c.l.b16 %v289
        %v594 = vunpack.c.h.b16 %v289
        %v595 = vunpack.c.l.b16 %v290
        %v596 = vunpack.c.h.b16 %v290
        %v597 = vunpack.c.l.b16 %v291
        %v598 = vunpack.c.h.b16 %v291
        %v599 = vunpack.c.l.b16 %v292
        %v600 = vunpack.c.h.b16 %v292
        %v601 = vunpack.c.l.b16 %v293
        %v602 = vunpack.c.h.b16 %v293
        %v603 = vunpack.c.l.b16 %v294
        %v604 = vunpack.c.h.b16 %v294
        %v605 = vunpack.c.l.b16 %v295
        %v606 = vunpack.c.h.b16 %v295
        %v607 = vunpack.c.l.b16 %v296
        %v608 = vunpack.c.h.b16 %v296
        %v609 = vunpack.c.l.b16 %v297
        %v610 = vunpack.c.h.b16 %v297
        %v611 = vunpack.c.l.b16 %v298
        %v612 = vunpack.c.h.b16 %v298
        %v613 = vunpack.c.l.b16 %v299
        %v614 = vunpack.c.h.b16 %v299
        %v615 = vunpack.c.l.b16 %v300
        %v616 = vunpack.c.h.b16 %v300
        %v617 = vunpack.c.l.b16 %v301
        %v618 = vunpack.c.h.b16 %v301
        %v619 = vunpack.c.l.b16 %v302
        %v620 = vunpack.c.h.b16 %v302
        %v621 = vunpack.c.l.b16 %v303
        %v622 = vunpack.c.h.b16 %v303
        %v623 = vunpack.c.l.b16 %v304
        %v624 = vunpack.c.h.b16 %v304
        %v625 = vunpack.c.l.b16 %v305
        %v626 = vunpack.c.h.b16 %v305
        %v627 = vunpack.c.l.b16 %v306
        %v628 = vunpack.c.h.b16 %v306
        %v629 = vunpack.c.l.b16 %v307
        %v630 = vunpack.c.h.b16 %v307
        %v631 = vunpack.c.l.b16 %v308
        %v632 = vunpack.c.h.b16 %v308
        %v633 = vunpack.c.l.b16 %v309
        %v634 = vunpack.c.h.b16 %v309
        %v635 = vunpack.c.l.b16 %v310
        %v636 = vunpack.c.h.b16 %v310
        %v637 = vunpack.c.l.b16 %v311
        %v638 = vunpack.c.h.b16 %v311
        %v639 = vunpack.c.l.b16 %v312
        %v640 = vunpack.c.h.b16 %v312
        %v641 = vpack.c.b16 %v455, %v449
        %v642 = vpack.c.b16 %v456, %v450
        %v643 = vpack.c.b16 %v457, %v451
        %v644 = vpack.c.b16 %v458, %v452
        %v645 = vpack.c.b16 %v459, %v453
        %v646 = vpack.c.b16 %v460, %v454
        %v647 = vpack.c.b16 %v467, %v461
        %v648 = vpack.c.b16 %v468, %v462
        %v649 = vpack.c.b16 %v469, %v463
        %v650 = vpack.c.b16 %v470, %v464
        %v651 = vpack.c.b16 %v471, %v465
        %v652 = vpack.c.b16 %v472, %v466
        %v653 = vpack.c.b16 %v479, %v473
        %v654 = vpack.c.b16 %v480, %v474
        %v655 = vpack.c.b16 %v481, %v475
        %v656 = vpack.c.b16 %v482, %v476
        %v657 = vpack.c.b16 %v483, %v477
        %v658 = vpack.c.b16 %v484, %v478
        %v659 = vpack.c.b16 %v491, %v485
        %v660 = vpack.c.b16 %v492, %v486
        %v661 = vpack.c.b16 %v493, %v487
        %v662 = vpack.c.b16 %v494, %v488
        %v663 = vpack.c.b16 %v495, %v489
        %v664 = vpack.c.b16 %v496, %v490
        %v665 = vpack.c.b16 %v503, %v497
        %v666 = vpack.c.b16 %v504, %v498
        %v667 = vpack.c.b16 %v505, %v499
        %v668 = vpack.c.b16 %v506, %v500
        %v669 = vpack.c.b16 %v507, %v501
        %v670 = vpack.c.b16 %v508, %v502
        %v671 = vpack.c.b16 %v515, %v509
        %v672 = vpack.c.b16 %v516, %v510
        %v673 = vpack.c.b16 %v517, %v511
        %v674 = vpack.c.b16 %v518, %v512
        %v675 = vpack.c.b16 %v519, %v513
        %v676 = vpack.c.b16 %v520, %v514
        %v677 = vpack.c.b16 %v527, %v521
        %v678 = vpack.c.b16 %v528, %v522
        %v679 = vpack.c.b16 %v529, %v523
        %v680 = vpack.c.b16 %v530, %v524
        %v681 = vpack.c.b16 %v531, %v525
        %v682 = vpack.c.b16 %v532, %v526
        %v683 = vpack.c.b16 %v539, %v533
        %v684 = vpack.c.b16 %v540, %v534
        %v685 = vpack.c.b16 %v541, %v535
        %v686 = vpack.c.b16 %v542, %v536
        %v687 = vpack.c.b16 %v543, %v537
        %v688 = vpack.c.b16 %v544, %v538
        %v689 = vpack.c.b16 %v551, %v545
        %v690 = vpack.c.b16 %v552, %v546
        %v691 = vpack.c.b16 %v553, %v547
        %v692 = vpack.c.b16 %v554, %v548
        %v693 = vpack.c.b16 %v555, %v549
        %v694 = vpack.c.b16 %v556, %v550
        %v695 = vpack.c.b16 %v563, %v557
        %v696 = vpack.c.b16 %v564, %v558
        %v697 = vpack.c.b16 %v565, %v559
        %v698 = vpack.c.b16 %v566, %v560
        %v699 = vpack.c.b16 %v567, %v561
        %v700 = vpack.c.b16 %v568, %v562
        %v701 = vpack.c.b16 %v575, %v569
        %v702 = vpack.c.b16 %v576, %v570
        %v703 = vpack.c.b16 %v577, %v571
        %v704 = vpack.c.b16 %v578, %v572
        %v705 = vpack.c.b16 %v579, %v573
        %v706 = vpack.c.b16 %v580, %v574
        %v707 = vpack.c.b16 %v587, %v581
        %v708 = vpack.c.b16 %v588, %v582
        %v709 = vpack.c.b16 %v589, %v583
        %v710 = vpack.c.b16 %v590, %v584
        %v711 = vpack.c.b16 %v591, %v585
        %v712 = vpack.c.b16 %v592, %v586
        %v713 = vpack.c.b16 %v599, %v593
        %v714 = vpack.c.b16 %v600, %v594
        %v715 = vpack.c.b16 %v601, %v595
        %v716 = vpack.c.b16 %v602, %v596
        %v717 = vpack.c.b16 %v603, %v597
        %v718 = vpack.c.b16 %v604, %v598
        %v719 = vpack.c.b16 %v611, %v605
        %v720 = vpack.c.b16 %v612, %v606
        %v721 = vpack.c.b16 %v613, %v607
        %v722 = vpack.c.b16 %v614, %v608
        %v723 = vpack.c.b16 %v615, %v609
        %v724 = vpack.c.b16 %v616, %v610
        %v725 = vpack.c.b16 %v623, %v617
        %v726 = vpack.c.b16 %v624, %v618
        %v727 = vpack.c.b16 %v625, %v619
        %v728 = vpack.c.b16 %v626, %v620
        %v729 = vpack.c.b16 %v627, %v621
        %v730 = vpack.c.b16 %v628, %v622
        %v731 = vpack.c.b16 %v635, %v629
        %v732 = vpack.c.b16 %v636, %v630
        %v733 = vpack.c.b16 %v637, %v631
        %v734 = vpack.c.b16 %v638, %v632
        %v735 = vpack.c.b16 %v639, %v633
        %v736 = vpack.c.b16 %v640, %v634
        %833 = vmatprep.subr.bf16.mxu0 %v642
        %834 = vmatpush1.bf16.msra.mxu0 %v641
        %835 = vmatprep.subr.bf16.mxu0 %v648
        %836 = vmatpush1.bf16.msra.mxu0 %v647
        %837 = vmatprep.subr.bf16.mxu0 %v654
        %838 = vmatpush1.bf16.msra.mxu0 %v653
        %839 = vmatprep.subr.bf16.mxu0 %v660
        %840 = vmatpush1.bf16.msra.mxu0 %v659
        %841 = vmatprep.subr.bf16.mxu0 %v666
        %842 = vmatpush1.bf16.msra.mxu0 %v665
        %843 = vmatprep.subr.bf16.mxu0 %v672
        %844 = vmatpush1.bf16.msra.mxu0 %v671
        %845 = vmatprep.subr.bf16.mxu0 %v678
        %846 = vmatpush1.bf16.msra.mxu0 %v677
        %847 = vmatprep.subr.bf16.mxu0 %v684
        %848 = vmatpush1.bf16.msra.mxu0 %v683
        %849 = vmatprep.subr.bf16.mxu0 %v690
        %850 = vmatpush1.bf16.msra.mxu0 %v689
        %851 = vmatprep.subr.bf16.mxu0 %v696
        %852 = vmatpush1.bf16.msra.mxu0 %v695
        %853 = vmatprep.subr.bf16.mxu0 %v702
        %854 = vmatpush1.bf16.msra.mxu0 %v701
        %855 = vmatprep.subr.bf16.mxu0 %v708
        %856 = vmatpush1.bf16.msra.mxu0 %v707
        %857 = vmatprep.subr.bf16.mxu0 %v714
        %858 = vmatpush1.bf16.msra.mxu0 %v713
        %859 = vmatprep.subr.bf16.mxu0 %v720
        %860 = vmatpush1.bf16.msra.mxu0 %v719
        %861 = vmatprep.subr.bf16.mxu0 %v726
        %862 = vmatpush1.bf16.msra.mxu0 %v725
        %863 = vmatprep.subr.bf16.mxu0 %v732
        %864 = vmatpush1.bf16.msra.mxu0 %v731
        %865 = vmatprep.mubr.bf16.mxu0 %v350
        %866 = vmatmul.mubr.bf16.gmra.mrb[0].mxu0 %v349
        %v867 = vpop.f32.mrb[0].mxu0
        %v868 = vadd.f32 0.0, %v867
        %v869 = vpop.f32.mrb[0].mxu0
        %v870 = vadd.f32 0.0, %v869
        %v871 = vpop.f32.mrb[0].mxu0
        %v872 = vpop.f32.mrb[0].mxu0
        %873 = vdwg.mxu0
        %874 = vmatprep.subr.bf16.mxu0 %v644
        %875 = vmatpush1.bf16.msra.mxu0 %v643
        %876 = vmatprep.subr.bf16.mxu0 %v650
        %877 = vmatpush1.bf16.msra.mxu0 %v649
        %878 = vmatprep.subr.bf16.mxu0 %v656
        %879 = vmatpush1.bf16.msra.mxu0 %v655
        %880 = vmatprep.subr.bf16.mxu0 %v662
        %881 = vmatpush1.bf16.msra.mxu0 %v661
        %882 = vmatprep.subr.bf16.mxu0 %v668
        %883 = vmatpush1.bf16.msra.mxu0 %v667
        %884 = vmatprep.subr.bf16.mxu0 %v674
        %885 = vmatpush1.bf16.msra.mxu0 %v673
        %886 = vmatprep.subr.bf16.mxu0 %v680
        %887 = vmatpush1.bf16.msra.mxu0 %v679
        %888 = vmatprep.subr.bf16.mxu0 %v686
        %889 = vmatpush1.bf16.msra.mxu0 %v685
        %890 = vmatprep.subr.bf16.mxu0 %v692
        %891 = vmatpush1.bf16.msra.mxu0 %v691
        %892 = vmatprep.subr.bf16.mxu0 %v698
        %893 = vmatpush1.bf16.msra.mxu0 %v697
        %894 = vmatprep.subr.bf16.mxu0 %v704
        %895 = vmatpush1.bf16.msra.mxu0 %v703
        %896 = vmatprep.subr.bf16.mxu0 %v710
        %897 = vmatpush1.bf16.msra.mxu0 %v709
        %898 = vmatprep.subr.bf16.mxu0 %v716
        %899 = vmatpush1.bf16.msra.mxu0 %v715
        %900 = vmatprep.subr.bf16.mxu0 %v722
        %901 = vmatpush1.bf16.msra.mxu0 %v721
        %902 = vmatprep.subr.bf16.mxu0 %v728
        %903 = vmatpush1.bf16.msra.mxu0 %v727
        %904 = vmatprep.subr.bf16.mxu0 %v734
        %905 = vmatpush1.bf16.msra.mxu0 %v733
        %906 = vmatprep.mubr.bf16.mxu0 %v350
        %907 = vmatmul.mubr.bf16.gmra.mrb[0].mxu0 %v349
        %v908 = vpop.f32.mrb[0].mxu0
        %v909 = vadd.f32 0.0, %v908
        %v910 = vpop.f32.mrb[0].mxu0
        %v911 = vadd.f32 0.0, %v910
        %v912 = vpop.f32.mrb[0].mxu0
        %v913 = vpop.f32.mrb[0].mxu0
        %914 = vdwg.mxu0
        %915 = vmatprep.subr.bf16.mxu0 %v646
        %916 = vmatpush1.bf16.msra.mxu0 %v645
        %917 = vmatprep.subr.bf16.mxu0 %v652
        %918 = vmatpush1.bf16.msra.mxu0 %v651
        %919 = vmatprep.subr.bf16.mxu0 %v658
        %920 = vmatpush1.bf16.msra.mxu0 %v657
        %921 = vmatprep.subr.bf16.mxu0 %v664
        %922 = vmatpush1.bf16.msra.mxu0 %v663
        %923 = vmatprep.subr.bf16.mxu0 %v670
        %924 = vmatpush1.bf16.msra.mxu0 %v669
        %925 = vmatprep.subr.bf16.mxu0 %v676
        %926 = vmatpush1.bf16.msra.mxu0 %v675
        %927 = vmatprep.subr.bf16.mxu0 %v682
        %928 = vmatpush1.bf16.msra.mxu0 %v681
        %929 = vmatprep.subr.bf16.mxu0 %v688
        %930 = vmatpush1.bf16.msra.mxu0 %v687
        %931 = vmatprep.subr.bf16.mxu0 %v694
        %932 = vmatpush1.bf16.msra.mxu0 %v693
        %933 = vmatprep.subr.bf16.mxu0 %v700
        %934 = vmatpush1.bf16.msra.mxu0 %v699
        %935 = vmatprep.subr.bf16.mxu0 %v706
        %936 = vmatpush1.bf16.msra.mxu0 %v705
        %937 = vmatprep.subr.bf16.mxu0 %v712
        %938 = vmatpush1.bf16.msra.mxu0 %v711
        %939 = vmatprep.subr.bf16.mxu0 %v718
        %940 = vmatpush1.bf16.msra.mxu0 %v717
        %941 = vmatprep.subr.bf16.mxu0 %v724
        %942 = vmatpush1.bf16.msra.mxu0 %v723
        %943 = vmatprep.subr.bf16.mxu0 %v730
        %944 = vmatpush1.bf16.msra.mxu0 %v729
        %945 = vmatprep.subr.bf16.mxu0 %v736
        %946 = vmatpush1.bf16.msra.mxu0 %v735
        %947 = vmatprep.mubr.bf16.mxu0 %v350
        %948 = vmatmul.mubr.bf16.gmra.mrb[0].mxu0 %v349
        %v949 = vpop.f32.mrb[0].mxu0
        %v950 = vadd.f32 0.0, %v949
        %v951 = vpop.f32.mrb[0].mxu0
        %v952 = vadd.f32 0.0, %v951
        %v953 = vpop.f32.mrb[0].mxu0
        %v954 = vpop.f32.mrb[0].mxu0
        %955 = vdwg.mxu0
        %v956 = vpack.c.bf16 %v868, %v868
        %v957 = vpack.c.bf16 %v870, %v870
        %v958 = vpack.c.bf16 %v909, %v909
        %v959 = vpack.c.bf16 %v911, %v911
        %v960 = vpack.c.bf16 %v950, %v950
        %v961 = vpack.c.bf16 %v952, %v952
        %vm962 = vcmask 523264
        %v964 = vsel %vm962, %v956, 0
        %v967 = vsel %vm962, %v958, 0
        %969 = vmatprep.subr.bf16.mxu0 0
        %970 = vmatpush1.bf16.xpose.msra.mxu0 %v967
        %971 = vmatprep.subr.bf16.mxu0 0
        %972 = vmatpush1.bf16.xpose.msra.mxu0 0
        %973 = vmatprep.subr.bf16.mxu0 0
        %974 = vmatpush1.bf16.xpose.msra.mxu0 0
        %975 = vmatprep.subr.bf16.mxu0 0
        %976 = vmatpush1.bf16.xpose.msra.mxu0 0
        %977 = vmatprep.subr.bf16.mxu0 0
        %978 = vmatpush1.bf16.xpose.msra.mxu0 0
        %979 = vmatprep.subr.bf16.mxu0 0
        %980 = vmatpush1.bf16.xpose.msra.mxu0 0
        %981 = vmatprep.subr.bf16.mxu0 0
        %982 = vmatpush1.bf16.xpose.msra.mxu0 0
        %983 = vmatprep.subr.bf16.mxu0 0
        %984 = vmatpush1.bf16.xpose.msra.mxu0 0
        %985 = vmatprep.subr.bf16.mxu0 0
        %986 = vmatpush1.bf16.xpose.msra.mxu0 0
        %987 = vmatprep.subr.bf16.mxu0 0
        %988 = vmatpush1.bf16.xpose.msra.mxu0 0
        %989 = vmatprep.subr.bf16.mxu0 0
        %990 = vmatpush1.bf16.xpose.msra.mxu0 0
        %991 = vmatprep.subr.bf16.mxu0 0
        %992 = vmatpush1.bf16.xpose.msra.mxu0 0
        %993 = vmatprep.subr.bf16.mxu0 0
        %994 = vmatpush1.bf16.xpose.msra.mxu0 0
        %995 = vmatprep.subr.bf16.mxu0 0
        %996 = vmatpush1.bf16.xpose.msra.mxu0 0
        %997 = vmatprep.subr.bf16.mxu0 0
        %998 = vmatpush1.bf16.xpose.msra.mxu0 0
        %999 = vmatprep.subr.bf16.mxu0 0
        %1000 = vmatpush1.bf16.xpose.msra.mxu0 0
        %1001 = vmatprep.mubr.bf16.mxu0 0
        %1002 = vmatmul.mubr.bf16.gmra.mrb[0].mxu0 %v964
        %v1003 = vpop.f32.mrb[0].mxu0
        %v1004 = vadd.f32 0.0, %v1003
        %v1005 = vpop.f32.mrb[0].mxu0
        %v1006 = vpop.f32.mrb[0].mxu0
        %v1007 = vpop.f32.mrb[0].mxu0
        %1008 = vdwg.mxu0
        %vm1009 = vcmask 64512
        %v1010 = vsel %vm1009, %v1004, -inf
        %1011 = vmax.xlane.f32.xlu0 %v1010
        %v1012 = vpop.xlane.xlu0 %1011
        %v1013 = vsub.f32 %v1004, %v1012
        %v1014 = vmul.f32 %v1013, 1.442695
        %v1015 = vpow.pop %v1014
        %v1016 = vsel %vm1009, %v1015, 0.0
        %1017 = vadd.xlane.f32.xlu0 %v1016
        %v1018 = vpop.xlane.xlu0 %1017
        %v1019 = vrcp.pop %v1018
        %v1020 = vmul.f32 %v1015, %v1019
        %v1021 = vpack.c.bf16 %v1020, %v1020
        %v1023 = vsel %vm1009, %v1021, 0
        %vm1025 = vcmask 1043456
        %v1027 = vsel %vm1025, %v960, 0
        %1029 = vmatprep.subr.bf16.mxu0 0
        %1030 = vmatpush1.bf16.msra.mxu0 %v1027
        %1031 = vmatprep.subr.bf16.mxu0 0
        %1032 = vmatpush1.bf16.msra.mxu0 0
        %1033 = vmatprep.subr.bf16.mxu0 0
        %1034 = vmatpush1.bf16.msra.mxu0 0
        %1035 = vmatprep.subr.bf16.mxu0 0
        %1036 = vmatpush1.bf16.msra.mxu0 0
        %1037 = vmatprep.subr.bf16.mxu0 0
        %1038 = vmatpush1.bf16.msra.mxu0 0
        %1039 = vmatprep.subr.bf16.mxu0 0
        %1040 = vmatpush1.bf16.msra.mxu0 0
        %1041 = vmatprep.subr.bf16.mxu0 0
        %1042 = vmatpush1.bf16.msra.mxu0 0
        %1043 = vmatprep.subr.bf16.mxu0 0
        %1044 = vmatpush1.bf16.msra.mxu0 0
        %1045 = vmatprep.subr.bf16.mxu0 0
        %1046 = vmatpush1.bf16.msra.mxu0 0
        %1047 = vmatprep.subr.bf16.mxu0 0
        %1048 = vmatpush1.bf16.msra.mxu0 0
        %1049 = vmatprep.subr.bf16.mxu0 0
        %1050 = vmatpush1.bf16.msra.mxu0 0
        %1051 = vmatprep.subr.bf16.mxu0 0
        %1052 = vmatpush1.bf16.msra.mxu0 0
        %1053 = vmatprep.subr.bf16.mxu0 0
        %1054 = vmatpush1.bf16.msra.mxu0 0
        %1055 = vmatprep.subr.bf16.mxu0 0
        %1056 = vmatpush1.bf16.msra.mxu0 0
        %1057 = vmatprep.subr.bf16.mxu0 0
        %1058 = vmatpush1.bf16.msra.mxu0 0
        %1059 = vmatprep.subr.bf16.mxu0 0
        %1060 = vmatpush1.bf16.msra.mxu0 0
        %1061 = vmatprep.mubr.bf16.mxu0 0
        %1062 = vmatmul.mubr.bf16.gmra.mrb[0].mxu0 %v1023
        %v1063 = vpop.f32.mrb[0].mxu0
        %v1064 = vadd.f32 0.0, %v1063
        %v1065 = vpop.f32.mrb[0].mxu0
        %v1066 = vpop.f32.mrb[0].mxu0
        %v1067 = vpop.f32.mrb[0].mxu0
        %1068 = vdwg.mxu0
        %v1069 = vpack.c.bf16 %v1064, %v1064
        %1071 = vrot.lane.b32.xlu0 %v956, 64
        %v1072 = vpop.permute.xlu0 %1071
        %1074 = vrot.lane.b32.xlu0 %v958, 64
        %v1075 = vpop.permute.xlu0 %1074
        %v1077 = vsel %vm962, %v1072, 0
        %v1080 = vsel %vm962, %v1075, 0
        %1082 = vmatprep.subr.bf16.mxu0 0
        %1083 = vmatpush1.bf16.xpose.msra.mxu0 %v1080
        %1084 = vmatprep.subr.bf16.mxu0 0
        %1085 = vmatpush1.bf16.xpose.msra.mxu0 0
        %1086 = vmatprep.subr.bf16.mxu0 0
        %1087 = vmatpush1.bf16.xpose.msra.mxu0 0
        %1088 = vmatprep.subr.bf16.mxu0 0
        %1089 = vmatpush1.bf16.xpose.msra.mxu0 0
        %1090 = vmatprep.subr.bf16.mxu0 0
        %1091 = vmatpush1.bf16.xpose.msra.mxu0 0
        %1092 = vmatprep.subr.bf16.mxu0 0
        %1093 = vmatpush1.bf16.xpose.msra.mxu0 0
        %1094 = vmatprep.subr.bf16.mxu0 0
        %1095 = vmatpush1.bf16.xpose.msra.mxu0 0
        %1096 = vmatprep.subr.bf16.mxu0 0
        %1097 = vmatpush1.bf16.xpose.msra.mxu0 0
        %1098 = vmatprep.subr.bf16.mxu0 0
        %1099 = vmatpush1.bf16.xpose.msra.mxu0 0
        %1100 = vmatprep.subr.bf16.mxu0 0
        %1101 = vmatpush1.bf16.xpose.msra.mxu0 0
        %1102 = vmatprep.subr.bf16.mxu0 0
        %1103 = vmatpush1.bf16.xpose.msra.mxu0 0
        %1104 = vmatprep.subr.bf16.mxu0 0
        %1105 = vmatpush1.bf16.xpose.msra.mxu0 0
        %1106 = vmatprep.subr.bf16.mxu0 0
        %1107 = vmatpush1.bf16.xpose.msra.mxu0 0
        %1108 = vmatprep.subr.bf16.mxu0 0
        %1109 = vmatpush1.bf16.xpose.msra.mxu0 0
        %1110 = vmatprep.subr.bf16.mxu0 0
        %1111 = vmatpush1.bf16.xpose.msra.mxu0 0
        %1112 = vmatprep.subr.bf16.mxu0 0
        %1113 = vmatpush1.bf16.xpose.msra.mxu0 0
        %1114 = vmatprep.mubr.bf16.mxu0 0
        %1115 = vmatmul.mubr.bf16.gmra.mrb[0].mxu0 %v1077
        %v1116 = vpop.f32.mrb[0].mxu0
        %v1117 = vadd.f32 0.0, %v1116
        %v1118 = vpop.f32.mrb[0].mxu0
        %v1119 = vpop.f32.mrb[0].mxu0
        %v1120 = vpop.f32.mrb[0].mxu0
        %1121 = vdwg.mxu0
        %v1122 = vsel %vm1009, %v1117, -inf
        %1123 = vmax.xlane.f32.xlu0 %v1122
        %v1124 = vpop.xlane.xlu0 %1123
        %v1125 = vsub.f32 %v1117, %v1124
        %v1126 = vmul.f32 %v1125, 1.442695
        %v1127 = vpow.pop %v1126
        %v1128 = vsel %vm1009, %v1127, 0.0
        %1129 = vadd.xlane.f32.xlu0 %v1128
        %v1130 = vpop.xlane.xlu0 %1129
        %v1131 = vrcp.pop %v1130
        %v1132 = vmul.f32 %v1127, %v1131
        %v1133 = vpack.c.bf16 %v1132, %v1132
        %1135 = vrot.lane.b32.xlu0 %v960, 64
        %v1136 = vpop.permute.xlu0 %1135
        %v1138 = vsel %vm1009, %v1133, 0
        %v1141 = vsel %vm1025, %v1136, 0
        %1143 = vmatprep.subr.bf16.mxu0 0
        %1144 = vmatpush1.bf16.msra.mxu0 %v1141
        %1145 = vmatprep.subr.bf16.mxu0 0
        %1146 = vmatpush1.bf16.msra.mxu0 0
        %1147 = vmatprep.subr.bf16.mxu0 0
        %1148 = vmatpush1.bf16.msra.mxu0 0
        %1149 = vmatprep.subr.bf16.mxu0 0
        %1150 = vmatpush1.bf16.msra.mxu0 0
        %1151 = vmatprep.subr.bf16.mxu0 0
        %1152 = vmatpush1.bf16.msra.mxu0 0
        %1153 = vmatprep.subr.bf16.mxu0 0
        %1154 = vmatpush1.bf16.msra.mxu0 0
        %1155 = vmatprep.subr.bf16.mxu0 0
        %1156 = vmatpush1.bf16.msra.mxu0 0
        %1157 = vmatprep.subr.bf16.mxu0 0
        %1158 = vmatpush1.bf16.msra.mxu0 0
        %1159 = vmatprep.subr.bf16.mxu0 0
        %1160 = vmatpush1.bf16.msra.mxu0 0
        %1161 = vmatprep.subr.bf16.mxu0 0
        %1162 = vmatpush1.bf16.msra.mxu0 0
        %1163 = vmatprep.subr.bf16.mxu0 0
        %1164 = vmatpush1.bf16.msra.mxu0 0
        %1165 = vmatprep.subr.bf16.mxu0 0
        %1166 = vmatpush1.bf16.msra.mxu0 0
        %1167 = vmatprep.subr.bf16.mxu0 0
        %1168 = vmatpush1.bf16.msra.mxu0 0
        %1169 = vmatprep.subr.bf16.mxu0 0
        %1170 = vmatpush1.bf16.msra.mxu0 0
        %1171 = vmatprep.subr.bf16.mxu0 0
        %1172 = vmatpush1.bf16.msra.mxu0 0
        %1173 = vmatprep.subr.bf16.mxu0 0
        %1174 = vmatpush1.bf16.msra.mxu0 0
        %1175 = vmatprep.mubr.bf16.mxu0 0
        %1176 = vmatmul.mubr.bf16.gmra.mrb[0].mxu0 %v1138
        %v1177 = vpop.f32.mrb[0].mxu0
        %v1178 = vadd.f32 0.0, %v1177
        %v1179 = vpop.f32.mrb[0].mxu0
        %v1180 = vpop.f32.mrb[0].mxu0
        %v1181 = vpop.f32.mrb[0].mxu0
        %1182 = vdwg.mxu0
        %v1183 = vpack.c.bf16 %v1178, %v1178
        %v1192 = vunpack.c.l.b16 %v321
        %v1193 = vunpack.c.h.b16 %v321
        %v1194 = vunpack.c.l.b16 %v322
        %v1195 = vunpack.c.h.b16 %v322
        %v1196 = vunpack.c.l.b16 %v323
        %v1197 = vunpack.c.h.b16 %v323
        %v1198 = vunpack.c.l.b16 %v324
        %v1199 = vunpack.c.h.b16 %v324
        %v1200 = vunpack.c.l.b16 %v325
        %v1201 = vunpack.c.h.b16 %v325
        %v1202 = vunpack.c.l.b16 %v326
        %v1203 = vunpack.c.h.b16 %v326
        %v1204 = vunpack.c.l.b16 %v327
        %v1205 = vunpack.c.h.b16 %v327
        %v1206 = vunpack.c.l.b16 %v328
        %v1207 = vunpack.c.h.b16 %v328
        %v1208 = vpack.c.b16 %v1194, %v1192
        %v1209 = vpack.c.b16 %v1195, %v1193
        %v1210 = vpack.c.b16 %v1198, %v1196
        %v1211 = vpack.c.b16 %v1199, %v1197
        %v1212 = vpack.c.b16 %v1202, %v1200
        %v1213 = vpack.c.b16 %v1203, %v1201
        %v1214 = vpack.c.b16 %v1206, %v1204
        %v1215 = vpack.c.b16 %v1207, %v1205
        %v1225 = vsel %vm962, %v1183, 0
        %1227 = vmatprep.subr.bf16.mxu0 %v1209
        %1228 = vmatpush1.bf16.msra.mxu0 %v1208
        %1229 = vmatprep.subr.bf16.mxu0 %v1211
        %1230 = vmatpush1.bf16.msra.mxu0 %v1210
        %1231 = vmatprep.subr.bf16.mxu0 %v1213
        %1232 = vmatpush1.bf16.msra.mxu0 %v1212
        %1233 = vmatprep.subr.bf16.mxu0 %v1215
        %1234 = vmatpush1.bf16.msra.mxu0 %v1214
        %1235 = vmatprep.subr.bf16.mxu0 0
        %1236 = vmatpush1.bf16.msra.mxu0 0
        %1237 = vmatprep.subr.bf16.mxu0 0
        %1238 = vmatpush1.bf16.msra.mxu0 0
        %1239 = vmatprep.subr.bf16.mxu0 0
        %1240 = vmatpush1.bf16.msra.mxu0 0
        %1241 = vmatprep.subr.bf16.mxu0 0
        %1242 = vmatpush1.bf16.msra.mxu0 0
        %1243 = vmatprep.subr.bf16.mxu0 0
        %1244 = vmatpush1.bf16.msra.mxu0 0
        %1245 = vmatprep.subr.bf16.mxu0 0
        %1246 = vmatpush1.bf16.msra.mxu0 0
        %1247 = vmatprep.subr.bf16.mxu0 0
        %1248 = vmatpush1.bf16.msra.mxu0 0
        %1249 = vmatprep.subr.bf16.mxu0 0
        %1250 = vmatpush1.bf16.msra.mxu0 0
        %1251 = vmatprep.subr.bf16.mxu0 0
        %1252 = vmatpush1.bf16.msra.mxu0 0
        %1253 = vmatprep.subr.bf16.mxu0 0
        %1254 = vmatpush1.bf16.msra.mxu0 0
        %1255 = vmatprep.subr.bf16.mxu0 0
        %1256 = vmatpush1.bf16.msra.mxu0 0
        %1257 = vmatprep.subr.bf16.mxu0 0
        %1258 = vmatpush1.bf16.msra.mxu0 0
        %1259 = vmatprep.mubr.bf16.mxu0 0
        %1260 = vmatmul.mubr.bf16.gmra.mrb[0].mxu0 %v1225
        %v1261 = vpop.f32.mrb[0].mxu0
        %v1262 = vadd.f32 0.0, %v1261
        %v1263 = vpop.f32.mrb[0].mxu0
        %v1264 = vadd.f32 0.0, %v1263
        %v1265 = vpop.f32.mrb[0].mxu0
        %v1266 = vpop.f32.mrb[0].mxu0
        %1267 = vdwg.mxu0
        %v1276 = vunpack.c.l.b16 %v313
        %v1277 = vunpack.c.h.b16 %v313
        %v1278 = vunpack.c.l.b16 %v314
        %v1279 = vunpack.c.h.b16 %v314
        %v1280 = vunpack.c.l.b16 %v315
        %v1281 = vunpack.c.h.b16 %v315
        %v1282 = vunpack.c.l.b16 %v316
        %v1283 = vunpack.c.h.b16 %v316
        %v1284 = vunpack.c.l.b16 %v317
        %v1285 = vunpack.c.h.b16 %v317
        %v1286 = vunpack.c.l.b16 %v318
        %v1287 = vunpack.c.h.b16 %v318
        %v1288 = vunpack.c.l.b16 %v319
        %v1289 = vunpack.c.h.b16 %v319
        %v1290 = vunpack.c.l.b16 %v320
        %v1291 = vunpack.c.h.b16 %v320
        %v1292 = vpack.c.b16 %v1278, %v1276
        %v1293 = vpack.c.b16 %v1279, %v1277
        %v1294 = vpack.c.b16 %v1282, %v1280
        %v1295 = vpack.c.b16 %v1283, %v1281
        %v1296 = vpack.c.b16 %v1286, %v1284
        %v1297 = vpack.c.b16 %v1287, %v1285
        %v1298 = vpack.c.b16 %v1290, %v1288
        %v1299 = vpack.c.b16 %v1291, %v1289
        %v1309 = vsel %vm962, %v1069, 0
        %1311 = vmatprep.subr.bf16.mxu0 %v1293
        %1312 = vmatpush1.bf16.msra.mxu0 %v1292
        %1313 = vmatprep.subr.bf16.mxu0 %v1295
        %1314 = vmatpush1.bf16.msra.mxu0 %v1294
        %1315 = vmatprep.subr.bf16.mxu0 %v1297
        %1316 = vmatpush1.bf16.msra.mxu0 %v1296
        %1317 = vmatprep.subr.bf16.mxu0 %v1299
        %1318 = vmatpush1.bf16.msra.mxu0 %v1298
        %1319 = vmatprep.subr.bf16.mxu0 0
        %1320 = vmatpush1.bf16.msra.mxu0 0
        %1321 = vmatprep.subr.bf16.mxu0 0
        %1322 = vmatpush1.bf16.msra.mxu0 0
        %1323 = vmatprep.subr.bf16.mxu0 0
        %1324 = vmatpush1.bf16.msra.mxu0 0
        %1325 = vmatprep.subr.bf16.mxu0 0
        %1326 = vmatpush1.bf16.msra.mxu0 0
        %1327 = vmatprep.subr.bf16.mxu0 0
        %1328 = vmatpush1.bf16.msra.mxu0 0
        %1329 = vmatprep.subr.bf16.mxu0 0
        %1330 = vmatpush1.bf16.msra.mxu0 0
        %1331 = vmatprep.subr.bf16.mxu0 0
        %1332 = vmatpush1.bf16.msra.mxu0 0
        %1333 = vmatprep.subr.bf16.mxu0 0
        %1334 = vmatpush1.bf16.msra.mxu0 0
        %1335 = vmatprep.subr.bf16.mxu0 0
        %1336 = vmatpush1.bf16.msra.mxu0 0
        %1337 = vmatprep.subr.bf16.mxu0 0
        %1338 = vmatpush1.bf16.msra.mxu0 0
        %1339 = vmatprep.subr.bf16.mxu0 0
        %1340 = vmatpush1.bf16.msra.mxu0 0
        %1341 = vmatprep.subr.bf16.mxu0 0
        %1342 = vmatpush1.bf16.msra.mxu0 0
        %1343 = vmatprep.mubr.bf16.mxu0 0
        %1344 = vmatmul.mubr.bf16.gmra.mrb[0].mxu0 %v1309
        %v1345 = vpop.f32.mrb[0].mxu0
        %v1346 = vadd.f32 %v1262, %v1345
        %v1347 = vpop.f32.mrb[0].mxu0
        %v1348 = vadd.f32 %v1264, %v1347
        %v1349 = vpop.f32.mrb[0].mxu0
        %v1350 = vpop.f32.mrb[0].mxu0
        %1351 = vdwg.mxu0
        %v1353 = vsel %vm962, %v957, 0
        %v1356 = vsel %vm962, %v959, 0
        %1358 = vmatprep.subr.bf16.mxu0 0
        %1359 = vmatpush1.bf16.xpose.msra.mxu0 %v1356
        %1360 = vmatprep.subr.bf16.mxu0 0
        %1361 = vmatpush1.bf16.xpose.msra.mxu0 0
        %1362 = vmatprep.subr.bf16.mxu0 0
        %1363 = vmatpush1.bf16.xpose.msra.mxu0 0
        %1364 = vmatprep.subr.bf16.mxu0 0
        %1365 = vmatpush1.bf16.xpose.msra.mxu0 0
        %1366 = vmatprep.subr.bf16.mxu0 0
        %1367 = vmatpush1.bf16.xpose.msra.mxu0 0
        %1368 = vmatprep.subr.bf16.mxu0 0
        %1369 = vmatpush1.bf16.xpose.msra.mxu0 0
        %1370 = vmatprep.subr.bf16.mxu0 0
        %1371 = vmatpush1.bf16.xpose.msra.mxu0 0
        %1372 = vmatprep.subr.bf16.mxu0 0
        %1373 = vmatpush1.bf16.xpose.msra.mxu0 0
        %1374 = vmatprep.subr.bf16.mxu0 0
        %1375 = vmatpush1.bf16.xpose.msra.mxu0 0
        %1376 = vmatprep.subr.bf16.mxu0 0
        %1377 = vmatpush1.bf16.xpose.msra.mxu0 0
        %1378 = vmatprep.subr.bf16.mxu0 0
        %1379 = vmatpush1.bf16.xpose.msra.mxu0 0
        %1380 = vmatprep.subr.bf16.mxu0 0
        %1381 = vmatpush1.bf16.xpose.msra.mxu0 0
        %1382 = vmatprep.subr.bf16.mxu0 0
        %1383 = vmatpush1.bf16.xpose.msra.mxu0 0
        %1384 = vmatprep.subr.bf16.mxu0 0
        %1385 = vmatpush1.bf16.xpose.msra.mxu0 0
        %1386 = vmatprep.subr.bf16.mxu0 0
        %1387 = vmatpush1.bf16.xpose.msra.mxu0 0
        %1388 = vmatprep.subr.bf16.mxu0 0
        %1389 = vmatpush1.bf16.xpose.msra.mxu0 0
        %1390 = vmatprep.mubr.bf16.mxu0 0
        %1391 = vmatmul.mubr.bf16.gmra.mrb[0].mxu0 %v1353
        %v1392 = vpop.f32.mrb[0].mxu0
        %v1393 = vadd.f32 0.0, %v1392
        %v1394 = vpop.f32.mrb[0].mxu0
        %v1395 = vpop.f32.mrb[0].mxu0
        %v1396 = vpop.f32.mrb[0].mxu0
        %1397 = vdwg.mxu0
        %v1398 = vsel %vm1009, %v1393, -inf
        %1399 = vmax.xlane.f32.xlu0 %v1398
        %v1400 = vpop.xlane.xlu0 %1399
        %v1401 = vsub.f32 %v1393, %v1400
        %v1402 = vmul.f32 %v1401, 1.442695
        %v1403 = vpow.pop %v1402
        %v1404 = vsel %vm1009, %v1403, 0.0
        %1405 = vadd.xlane.f32.xlu0 %v1404
        %v1406 = vpop.xlane.xlu0 %1405
        %v1407 = vrcp.pop %v1406
        %v1408 = vmul.f32 %v1403, %v1407
        %v1409 = vpack.c.bf16 %v1408, %v1408
        %v1411 = vsel %vm1009, %v1409, 0
        %v1414 = vsel %vm1025, %v961, 0
        %1416 = vmatprep.subr.bf16.mxu0 0
        %1417 = vmatpush1.bf16.msra.mxu0 %v1414
        %1418 = vmatprep.subr.bf16.mxu0 0
        %1419 = vmatpush1.bf16.msra.mxu0 0
        %1420 = vmatprep.subr.bf16.mxu0 0
        %1421 = vmatpush1.bf16.msra.mxu0 0
        %1422 = vmatprep.subr.bf16.mxu0 0
        %1423 = vmatpush1.bf16.msra.mxu0 0
        %1424 = vmatprep.subr.bf16.mxu0 0
        %1425 = vmatpush1.bf16.msra.mxu0 0
        %1426 = vmatprep.subr.bf16.mxu0 0
        %1427 = vmatpush1.bf16.msra.mxu0 0
        %1428 = vmatprep.subr.bf16.mxu0 0
        %1429 = vmatpush1.bf16.msra.mxu0 0
        %1430 = vmatprep.subr.bf16.mxu0 0
        %1431 = vmatpush1.bf16.msra.mxu0 0
        %1432 = vmatprep.subr.bf16.mxu0 0
        %1433 = vmatpush1.bf16.msra.mxu0 0
        %1434 = vmatprep.subr.bf16.mxu0 0
        %1435 = vmatpush1.bf16.msra.mxu0 0
        %1436 = vmatprep.subr.bf16.mxu0 0
        %1437 = vmatpush1.bf16.msra.mxu0 0
        %1438 = vmatprep.subr.bf16.mxu0 0
        %1439 = vmatpush1.bf16.msra.mxu0 0
        %1440 = vmatprep.subr.bf16.mxu0 0
        %1441 = vmatpush1.bf16.msra.mxu0 0
        %1442 = vmatprep.subr.bf16.mxu0 0
        %1443 = vmatpush1.bf16.msra.mxu0 0
        %1444 = vmatprep.subr.bf16.mxu0 0
        %1445 = vmatpush1.bf16.msra.mxu0 0
        %1446 = vmatprep.subr.bf16.mxu0 0
        %1447 = vmatpush1.bf16.msra.mxu0 0
        %1448 = vmatprep.mubr.bf16.mxu0 0
        %1449 = vmatmul.mubr.bf16.gmra.mrb[0].mxu0 %v1411
        %v1450 = vpop.f32.mrb[0].mxu0
        %v1451 = vadd.f32 0.0, %v1450
        %v1452 = vpop.f32.mrb[0].mxu0
        %v1453 = vpop.f32.mrb[0].mxu0
        %v1454 = vpop.f32.mrb[0].mxu0
        %1455 = vdwg.mxu0
        %v1456 = vpack.c.bf16 %v1451, %v1451
        %v1465 = vunpack.c.l.b16 %v329
        %v1466 = vunpack.c.h.b16 %v329
        %v1467 = vunpack.c.l.b16 %v330
        %v1468 = vunpack.c.h.b16 %v330
        %v1469 = vunpack.c.l.b16 %v331
        %v1470 = vunpack.c.h.b16 %v331
        %v1471 = vunpack.c.l.b16 %v332
        %v1472 = vunpack.c.h.b16 %v332
        %v1473 = vunpack.c.l.b16 %v333
        %v1474 = vunpack.c.h.b16 %v333
        %v1475 = vunpack.c.l.b16 %v334
        %v1476 = vunpack.c.h.b16 %v334
        %v1477 = vunpack.c.l.b16 %v335
        %v1478 = vunpack.c.h.b16 %v335
        %v1479 = vunpack.c.l.b16 %v336
        %v1480 = vunpack.c.h.b16 %v336
        %v1481 = vpack.c.b16 %v1467, %v1465
        %v1482 = vpack.c.b16 %v1468, %v1466
        %v1483 = vpack.c.b16 %v1471, %v1469
        %v1484 = vpack.c.b16 %v1472, %v1470
        %v1485 = vpack.c.b16 %v1475, %v1473
        %v1486 = vpack.c.b16 %v1476, %v1474
        %v1487 = vpack.c.b16 %v1479, %v1477
        %v1488 = vpack.c.b16 %v1480, %v1478
        %v1498 = vsel %vm962, %v1456, 0
        %1500 = vmatprep.subr.bf16.mxu0 %v1482
        %1501 = vmatpush1.bf16.msra.mxu0 %v1481
        %1502 = vmatprep.subr.bf16.mxu0 %v1484
        %1503 = vmatpush1.bf16.msra.mxu0 %v1483
        %1504 = vmatprep.subr.bf16.mxu0 %v1486
        %1505 = vmatpush1.bf16.msra.mxu0 %v1485
        %1506 = vmatprep.subr.bf16.mxu0 %v1488
        %1507 = vmatpush1.bf16.msra.mxu0 %v1487
        %1508 = vmatprep.subr.bf16.mxu0 0
        %1509 = vmatpush1.bf16.msra.mxu0 0
        %1510 = vmatprep.subr.bf16.mxu0 0
        %1511 = vmatpush1.bf16.msra.mxu0 0
        %1512 = vmatprep.subr.bf16.mxu0 0
        %1513 = vmatpush1.bf16.msra.mxu0 0
        %1514 = vmatprep.subr.bf16.mxu0 0
        %1515 = vmatpush1.bf16.msra.mxu0 0
        %1516 = vmatprep.subr.bf16.mxu0 0
        %1517 = vmatpush1.bf16.msra.mxu0 0
        %1518 = vmatprep.subr.bf16.mxu0 0
        %1519 = vmatpush1.bf16.msra.mxu0 0
        %1520 = vmatprep.subr.bf16.mxu0 0
        %1521 = vmatpush1.bf16.msra.mxu0 0
        %1522 = vmatprep.subr.bf16.mxu0 0
        %1523 = vmatpush1.bf16.msra.mxu0 0
        %1524 = vmatprep.subr.bf16.mxu0 0
        %1525 = vmatpush1.bf16.msra.mxu0 0
        %1526 = vmatprep.subr.bf16.mxu0 0
        %1527 = vmatpush1.bf16.msra.mxu0 0
        %1528 = vmatprep.subr.bf16.mxu0 0
        %1529 = vmatpush1.bf16.msra.mxu0 0
        %1530 = vmatprep.subr.bf16.mxu0 0
        %1531 = vmatpush1.bf16.msra.mxu0 0
        %1532 = vmatprep.mubr.bf16.mxu0 0
        %1533 = vmatmul.mubr.bf16.gmra.mrb[0].mxu0 %v1498
        %v1534 = vpop.f32.mrb[0].mxu0
        %v1535 = vadd.f32 0.0, %v1534
        %v1536 = vpop.f32.mrb[0].mxu0
        %v1537 = vadd.f32 0.0, %v1536
        %v1538 = vpop.f32.mrb[0].mxu0
        %v1539 = vpop.f32.mrb[0].mxu0
        %1540 = vdwg.mxu0
        %v1541 = vadd.f32 %v1346, %v1535
        %v1542 = vadd.f32 %v1348, %v1537
        %1544 = vrot.lane.b32.xlu0 %v957, 64
        %v1545 = vpop.permute.xlu0 %1544
        %1547 = vrot.lane.b32.xlu0 %v959, 64
        %v1548 = vpop.permute.xlu0 %1547
        %v1550 = vsel %vm962, %v1545, 0
        %v1553 = vsel %vm962, %v1548, 0
        %1555 = vmatprep.subr.bf16.mxu0 0
        %1556 = vmatpush1.bf16.xpose.msra.mxu0 %v1553
        %1557 = vmatprep.subr.bf16.mxu0 0
        %1558 = vmatpush1.bf16.xpose.msra.mxu0 0
        %1559 = vmatprep.subr.bf16.mxu0 0
        %1560 = vmatpush1.bf16.xpose.msra.mxu0 0
        %1561 = vmatprep.subr.bf16.mxu0 0
        %1562 = vmatpush1.bf16.xpose.msra.mxu0 0
        %1563 = vmatprep.subr.bf16.mxu0 0
        %1564 = vmatpush1.bf16.xpose.msra.mxu0 0
        %1565 = vmatprep.subr.bf16.mxu0 0
        %1566 = vmatpush1.bf16.xpose.msra.mxu0 0
        %1567 = vmatprep.subr.bf16.mxu0 0
        %1568 = vmatpush1.bf16.xpose.msra.mxu0 0
        %1569 = vmatprep.subr.bf16.mxu0 0
        %1570 = vmatpush1.bf16.xpose.msra.mxu0 0
        %1571 = vmatprep.subr.bf16.mxu0 0
        %1572 = vmatpush1.bf16.xpose.msra.mxu0 0
        %1573 = vmatprep.subr.bf16.mxu0 0
        %1574 = vmatpush1.bf16.xpose.msra.mxu0 0
        %1575 = vmatprep.subr.bf16.mxu0 0
        %1576 = vmatpush1.bf16.xpose.msra.mxu0 0
        %1577 = vmatprep.subr.bf16.mxu0 0
        %1578 = vmatpush1.bf16.xpose.msra.mxu0 0
        %1579 = vmatprep.subr.bf16.mxu0 0
        %1580 = vmatpush1.bf16.xpose.msra.mxu0 0
        %1581 = vmatprep.subr.bf16.mxu0 0
        %1582 = vmatpush1.bf16.xpose.msra.mxu0 0
        %1583 = vmatprep.subr.bf16.mxu0 0
        %1584 = vmatpush1.bf16.xpose.msra.mxu0 0
        %1585 = vmatprep.subr.bf16.mxu0 0
        %1586 = vmatpush1.bf16.xpose.msra.mxu0 0
        %1587 = vmatprep.mubr.bf16.mxu0 0
        %1588 = vmatmul.mubr.bf16.gmra.mrb[0].mxu0 %v1550
        %v1589 = vpop.f32.mrb[0].mxu0
        %v1590 = vadd.f32 0.0, %v1589
        %v1591 = vpop.f32.mrb[0].mxu0
        %v1592 = vpop.f32.mrb[0].mxu0
        %v1593 = vpop.f32.mrb[0].mxu0
        %1594 = vdwg.mxu0
        %v1595 = vsel %vm1009, %v1590, -inf
        %1596 = vmax.xlane.f32.xlu0 %v1595
        %v1597 = vpop.xlane.xlu0 %1596
        %v1598 = vsub.f32 %v1590, %v1597
        %v1599 = vmul.f32 %v1598, 1.442695
        %v1600 = vpow.pop %v1599
        %v1601 = vsel %vm1009, %v1600, 0.0
        %1602 = vadd.xlane.f32.xlu0 %v1601
        %v1603 = vpop.xlane.xlu0 %1602
        %v1604 = vrcp.pop %v1603
        %v1605 = vmul.f32 %v1600, %v1604
        %v1606 = vpack.c.bf16 %v1605, %v1605
        %1608 = vrot.lane.b32.xlu0 %v961, 64
        %v1609 = vpop.permute.xlu0 %1608
        %v1611 = vsel %vm1009, %v1606, 0
        %v1614 = vsel %vm1025, %v1609, 0
        %1616 = vmatprep.subr.bf16.mxu0 0
        %1617 = vmatpush1.bf16.msra.mxu0 %v1614
        %1618 = vmatprep.subr.bf16.mxu0 0
        %1619 = vmatpush1.bf16.msra.mxu0 0
        %1620 = vmatprep.subr.bf16.mxu0 0
        %1621 = vmatpush1.bf16.msra.mxu0 0
        %1622 = vmatprep.subr.bf16.mxu0 0
        %1623 = vmatpush1.bf16.msra.mxu0 0
        %1624 = vmatprep.subr.bf16.mxu0 0
        %1625 = vmatpush1.bf16.msra.mxu0 0
        %1626 = vmatprep.subr.bf16.mxu0 0
        %1627 = vmatpush1.bf16.msra.mxu0 0
        %1628 = vmatprep.subr.bf16.mxu0 0
        %1629 = vmatpush1.bf16.msra.mxu0 0
        %1630 = vmatprep.subr.bf16.mxu0 0
        %1631 = vmatpush1.bf16.msra.mxu0 0
        %1632 = vmatprep.subr.bf16.mxu0 0
        %1633 = vmatpush1.bf16.msra.mxu0 0
        %1634 = vmatprep.subr.bf16.mxu0 0
        %1635 = vmatpush1.bf16.msra.mxu0 0
        %1636 = vmatprep.subr.bf16.mxu0 0
        %1637 = vmatpush1.bf16.msra.mxu0 0
        %1638 = vmatprep.subr.bf16.mxu0 0
        %1639 = vmatpush1.bf16.msra.mxu0 0
        %1640 = vmatprep.subr.bf16.mxu0 0
        %1641 = vmatpush1.bf16.msra.mxu0 0
        %1642 = vmatprep.subr.bf16.mxu0 0
        %1643 = vmatpush1.bf16.msra.mxu0 0
        %1644 = vmatprep.subr.bf16.mxu0 0
        %1645 = vmatpush1.bf16.msra.mxu0 0
        %1646 = vmatprep.subr.bf16.mxu0 0
        %1647 = vmatpush1.bf16.msra.mxu0 0
        %1648 = vmatprep.mubr.bf16.mxu0 0
        %1649 = vmatmul.mubr.bf16.gmra.mrb[0].mxu0 %v1611
        %v1650 = vpop.f32.mrb[0].mxu0
        %v1651 = vadd.f32 0.0, %v1650
        %v1652 = vpop.f32.mrb[0].mxu0
        %v1653 = vpop.f32.mrb[0].mxu0
        %v1654 = vpop.f32.mrb[0].mxu0
        %1655 = vdwg.mxu0
        %v1656 = vpack.c.bf16 %v1651, %v1651
        %v1665 = vunpack.c.l.b16 %v337
        %v1666 = vunpack.c.h.b16 %v337
        %v1667 = vunpack.c.l.b16 %v338
        %v1668 = vunpack.c.h.b16 %v338
        %v1669 = vunpack.c.l.b16 %v339
        %v1670 = vunpack.c.h.b16 %v339
        %v1671 = vunpack.c.l.b16 %v340
        %v1672 = vunpack.c.h.b16 %v340
        %v1673 = vunpack.c.l.b16 %v341
        %v1674 = vunpack.c.h.b16 %v341
        %v1675 = vunpack.c.l.b16 %v342
        %v1676 = vunpack.c.h.b16 %v342
        %v1677 = vunpack.c.l.b16 %v343
        %v1678 = vunpack.c.h.b16 %v343
        %v1679 = vunpack.c.l.b16 %v344
        %v1680 = vunpack.c.h.b16 %v344
        %v1681 = vpack.c.b16 %v1667, %v1665
        %v1682 = vpack.c.b16 %v1668, %v1666
        %v1683 = vpack.c.b16 %v1671, %v1669
        %v1684 = vpack.c.b16 %v1672, %v1670
        %v1685 = vpack.c.b16 %v1675, %v1673
        %v1686 = vpack.c.b16 %v1676, %v1674
        %v1687 = vpack.c.b16 %v1679, %v1677
        %v1688 = vpack.c.b16 %v1680, %v1678
        %v1698 = vsel %vm962, %v1656, 0
        %1700 = vmatprep.subr.bf16.mxu0 %v1682
        %1701 = vmatpush1.bf16.msra.mxu0 %v1681
        %1702 = vmatprep.subr.bf16.mxu0 %v1684
        %1703 = vmatpush1.bf16.msra.mxu0 %v1683
        %1704 = vmatprep.subr.bf16.mxu0 %v1686
        %1705 = vmatpush1.bf16.msra.mxu0 %v1685
        %1706 = vmatprep.subr.bf16.mxu0 %v1688
        %1707 = vmatpush1.bf16.msra.mxu0 %v1687
        %1708 = vmatprep.subr.bf16.mxu0 0
        %1709 = vmatpush1.bf16.msra.mxu0 0
        %1710 = vmatprep.subr.bf16.mxu0 0
        %1711 = vmatpush1.bf16.msra.mxu0 0
        %1712 = vmatprep.subr.bf16.mxu0 0
        %1713 = vmatpush1.bf16.msra.mxu0 0
        %1714 = vmatprep.subr.bf16.mxu0 0
        %1715 = vmatpush1.bf16.msra.mxu0 0
        %1716 = vmatprep.subr.bf16.mxu0 0
        %1717 = vmatpush1.bf16.msra.mxu0 0
        %1718 = vmatprep.subr.bf16.mxu0 0
        %1719 = vmatpush1.bf16.msra.mxu0 0
        %1720 = vmatprep.subr.bf16.mxu0 0
        %1721 = vmatpush1.bf16.msra.mxu0 0
        %1722 = vmatprep.subr.bf16.mxu0 0
        %1723 = vmatpush1.bf16.msra.mxu0 0
        %1724 = vmatprep.subr.bf16.mxu0 0
        %1725 = vmatpush1.bf16.msra.mxu0 0
        %1726 = vmatprep.subr.bf16.mxu0 0
        %1727 = vmatpush1.bf16.msra.mxu0 0
        %1728 = vmatprep.subr.bf16.mxu0 0
        %1729 = vmatpush1.bf16.msra.mxu0 0
        %1730 = vmatprep.subr.bf16.mxu0 0
        %1731 = vmatpush1.bf16.msra.mxu0 0
        %1732 = vmatprep.mubr.bf16.mxu0 0
        %1733 = vmatmul.mubr.bf16.gmra.mrb[0].mxu0 %v1698
        %v1734 = vpop.f32.mrb[0].mxu0
        %v1735 = vadd.f32 0.0, %v1734
        %v1736 = vpop.f32.mrb[0].mxu0
        %v1737 = vadd.f32 0.0, %v1736
        %v1738 = vpop.f32.mrb[0].mxu0
        %v1739 = vpop.f32.mrb[0].mxu0
        %1740 = vdwg.mxu0
        %v1741 = vadd.f32 %v1541, %v1735
        %v1742 = vadd.f32 %v1542, %v1737
        %1743 = vst [vmem:[%s215] sm:$0xff] %v1741
        %1744 = vst [vmem:[%s215 + $0x8] sm:$0xff] %v1742
        %s1745 = sand.u32 %s97, 1
        %s1746 = scalar_lea.sflag [#allocation4], %s1745
        %s1747 = sand.u32 %s97, 1
        %s1748 = smul.addr %s1747, 16
        %s1749 = scalar_lea.vmem [#allocation8], %s1748
        // Predicated region
        $region45: #{tpu_custom_call.1} parent=31 // pred_check
          %p1750 = pneg %p107
        $region46: #{tpu_custom_call.1} parent=31 // pred_check_branch
          %1752 = sbr.rel (%p1750) target = $region48
        $region47: #{tpu_custom_call.1} parent=31 // pred_region
          %s1754 = ssub.s32 256, 256
          %1755 = vsyncadd %s1746, %s1754
          %s1756 = smul.addr %s21, 2
          %s1757 = smul.addr %s1756, 128
          %s1758 = scalar_lea.hbm %s3, %s1757
          %s1760 = sshll.u32 %s1749, 4
          %s1761 = int_to_ptr.vmem [resolvable:$true] %s1760
          %1763 = dma.vmem_to_hbm [thread:$0]  %s1761, 256, %s1758, %s1746
        $region48: #{tpu_custom_call.1} parent=31 // pred_fallthru
          _
      $region32: #{tpu_custom_call.1} parent=5 // pred_fallthru
        _
      %p1764 = scmp.le.s32.totalorder 2, %s16
      // Predicated region
      $region49: #{tpu_custom_call.1} parent=5 // pred_check
        %p1765 = pneg %p1764
      $region50: #{tpu_custom_call.1} parent=5 // pred_check_branch
        %1767 = sbr.rel (%p1765) target = $region52
      $region51: #{tpu_custom_call.1} parent=5 // pred_region
        %s1768 = ssub.s32 %s16, 2
        // Predicated region
        $region53: #{tpu_custom_call.1} parent=51 // pred_check
          %p1769 = pneg %p113
        $region54: #{tpu_custom_call.1} parent=51 // pred_check_branch
          %1771 = sbr.rel (%p1769) target = $region56
        $region55: #{tpu_custom_call.1} parent=51 // pred_region
          %s1772 = sand.u32 %s98, 1
          %s1773 = scalar_lea.sflag [#allocation4], %s1772
          %s1774 = sand.u32 %s98, 1
          %s1775 = smul.addr %s1774, 16
          %s1776 = scalar_lea.vmem [#allocation8], %s1775
          %1777 = dma.done %s1773, 256
        $region56: #{tpu_custom_call.1} parent=51 // pred_fallthru
          _
      $region52: #{tpu_custom_call.1} parent=5 // pred_fallthru
        _
    $region6: #{tpu_custom_call.1} parent=1 // loop_footer
      %s20 = sadd.s32 1, %s16
    $region7: #{tpu_custom_call.1} parent=1 // loop_footer_branch
      %15 = sbr.rel target = $region3
    $region8: #{tpu_custom_call.1} parent=1 // loop_exit
      _
    %1778 = vsyncpa [#allocation3], 1
    %s1779 = scalar_lea.sflag [#allocation3], 1
    %1780 = vsyncpa %s1779, 1
    %1781 = vsyncpa [#allocation6], 1
    %1782 = vsyncpa [#allocation4], 1
    %s1783 = scalar_lea.sflag [#allocation4], 1
    %1784 = vsyncpa %s1783, 1

</llo_original>
